<compile_context>
chip_gen: v6e
topology: v6e:2x2x1
jax: 0.10.0
libtpu: 0.0.40
codegen_flags: <defaults>
</compile_context>

<pallas_src>
import functools

import jax
import jax.numpy as jnp
import numpy as np
from jax.experimental import pallas as pl
from jax.experimental.pallas import tpu as pltpu


def _self_attention_kernel(x_ref, wqkv_ref, bqkv_ref, wo_ref, bo_ref, o_ref,
                           av_scr, *, num_heads: int, head_dim: int, exp_dtype):
    """Channels-on-sublanes / tokens-on-lanes self-attention.

    x_ref    : (bb, C, S)  bf16   batch slice for this grid step (transposed layout)
    wqkv_ref : (3C, C)     bf16   fused QKV weight (transposed); 1/sqrt(hd) folded into Q rows
    bqkv_ref : (3C, 1)     f32    fused QKV bias (Q part pre-scaled)
    wo_ref   : (C, C)      bf16   output projection (transposed)
    bo_ref   : (C, 1)      f32
    o_ref    : (bb, C, S)  f32
    av_scr   : (C, S)      f32    VMEM scratch: per-element attention values (all heads)
    """
    bb = x_ref.shape[0]
    c = wo_ref.shape[0]

    wqkv = wqkv_ref[...]          # (3C, C) bf16
    bqkv = bqkv_ref[...]          # (3C, 1) f32
    wo = wo_ref[...]              # (C, C)  bf16
    bo = bo_ref[...]              # (C, 1)  f32

    for bi in range(bb):                      # batch_block is small (default 1)
        x_b = x_ref[bi]                       # (C, S) bf16

        # One fused QKV projection (single MXU op) + one bias broadcast.
        qkv = jnp.dot(wqkv, x_b, preferred_element_type=jnp.float32) + bqkv  # (3C, S) f32

        for n in range(num_heads):            # static & small -> unrolled
            o0 = n * head_dim
            o1 = o0 + head_dim
            # Per-head slices are sublane slices (multiples of 8 rows).
            q_t = qkv[o0:o1, :].astype(jnp.bfloat16)                 # (hd, S)
            k_nt = qkv[c + o0:c + o1, :].T.astype(jnp.bfloat16)      # (S, hd)
            v_t = qkv[2 * c + o0:2 * c + o1, :].astype(jnp.bfloat16)  # (hd, S)

            # scores^T: (S_k, S_q); softmax scale already folded into W_Q/b_Q.
            s_t = jnp.dot(k_nt, q_t, preferred_element_type=jnp.float32)
            s_t = s_t - jnp.max(s_t, axis=0, keepdims=True)
            p = jnp.exp(s_t.astype(exp_dtype))                       # bf16 exp on v6e/v7x
            denom = jnp.sum(p.astype(jnp.float32), axis=0, keepdims=True)  # (1, S_q)

            # P@V first, normalize the small (hd, S) result afterwards.
            pv = jnp.dot(v_t, p.astype(jnp.bfloat16),
                         preferred_element_type=jnp.float32)          # (hd, S_q)
            av_scr[o0:o1, :] = pv * pl.reciprocal(denom, approx=True)

        # Output projection over all heads at once + bias; lane-dense store.
        out_t = jnp.dot(wo, av_scr[...].astype(jnp.bfloat16),
                        preferred_element_type=jnp.float32) + bo      # (C, S)
        o_ref[bi] = out_t.astype(o_ref.dtype)


def prepare_self_attention_params(w_qkv, b_qkv, w_o, b_o, *, channels: int,
                                  num_heads: int):
    """One-time weight prep (hoisted out of the per-call wrapper).

    w_qkv: (C, 3C), b_qkv: (3C,), w_o: (C, C), b_o: (C,) with math x @ W + b.
    """
    head_dim = channels // num_heads
    scale = 1.0 / (head_dim ** 0.5)
    scale_vec = jnp.concatenate([
        jnp.full((channels,), scale, jnp.float32),      # fold 1/sqrt(hd) into Q
        jnp.ones((2 * channels,), jnp.float32),
    ])
    wqkv_t = (w_qkv.T.astype(jnp.float32) * scale_vec[:, None]).astype(jnp.bfloat16)
    bqkv = (b_qkv.astype(jnp.float32) * scale_vec).reshape(3 * channels, 1)
    wo_t = w_o.T.astype(jnp.bfloat16)
    bo = b_o.astype(jnp.float32).reshape(channels, 1)
    return {"wqkv_t": wqkv_t, "bqkv": bqkv, "wo_t": wo_t, "bo": bo}


def self_attention_2d(x, params, *, num_heads: int, batch_block: int = 1,
                      use_bf16_exp=None):
    """x: (B, C, H, W) float32. Returns (B, C, H, W)."""
    b, c, h, w = x.shape
    assert c % num_heads == 0
    head_dim = c // num_heads
    s = h * w
    assert b % batch_block == 0

    if use_bf16_exp is None:
        # bf16 EUP exists on v6e/v7x; keep f32 exp on v4/v5 (no bf16 VPU/EUP).
        kind = jax.devices()[0].device_kind.lower()
        use_bf16_exp = not any(tag in kind for tag in ("v2", "v3", "v4", "v5"))
    exp_dtype = jnp.bfloat16 if use_bf16_exp else jnp.float32

    # NCHW -> (b, C, S): pure reshape, no transpose; bf16 halves the x DMA.
    x3d = x.reshape(b, c, s).astype(jnp.bfloat16)

    kernel = functools.partial(_self_attention_kernel, num_heads=num_heads,
                               head_dim=head_dim, exp_dtype=exp_dtype)

    out3d = pl.pallas_call(
        kernel,
        out_shape=jax.ShapeDtypeStruct((b, c, s), jnp.float32),
        grid_spec=pltpu.PrefetchScalarGridSpec(
            num_scalar_prefetch=0,
            grid=(b // batch_block,),
            in_specs=[
                pl.BlockSpec((batch_block, c, s), lambda i: (i, 0, 0)),  # x
                pl.BlockSpec((3 * c, c), lambda i: (0, 0)),              # W_QKV^T
                pl.BlockSpec((3 * c, 1), lambda i: (0, 0)),              # b_QKV
                pl.BlockSpec((c, c), lambda i: (0, 0)),                  # W_O^T
                pl.BlockSpec((c, 1), lambda i: (0, 0)),                  # b_O
            ],
            out_specs=pl.BlockSpec((batch_block, c, s), lambda i: (i, 0, 0)),
            scratch_shapes=[pltpu.VMEM((c, s), jnp.float32)],            # att values
        ),
        compiler_params=pltpu.CompilerParams(
            dimension_semantics=("parallel",)),
    )(x3d, params["wqkv_t"], params["bqkv"], params["wo_t"], params["bo"])

    # (b, C, S) -> (b, C, H, W): pure reshape.
    return out3d.reshape(b, c, h, w).astype(x.dtype)


def _reference(x, w_qkv, b_qkv, w_o, b_o, *, num_heads: int):
    """Plain-JAX f32 reference mirroring the PyTorch forward exactly."""
    b, c, h, w = x.shape
    headsize = c // num_heads
    x_flat = jnp.transpose(x, (0, 2, 3, 1)).reshape(b, h * w, c)
    qkv = x_flat @ w_qkv + b_qkv
    q, k, v = jnp.split(qkv, 3, axis=-1)
    q = q.reshape(b, h * w, num_heads, headsize)
    k = k.reshape(b, h * w, num_heads, headsize)
    v = v.reshape(b, h * w, num_heads, headsize)
    scores = jnp.einsum('bqnh,bknh->bnqk', q, k) / headsize ** 0.5
    probs = jax.nn.softmax(scores, axis=-1)
    vals = jnp.einsum('bnqk,bknh->bqnh', probs, v).reshape(b, h * w, c)
    out = vals @ w_o + b_o
    return jnp.transpose(out.reshape(b, h, w, c), (0, 3, 1, 2))


if __name__ == "__main__":
    batch, channels, height, width = 2, 32, 8, 8
    num_heads = 4

    key = jax.random.PRNGKey(0)
    kx, kwq, kbq, kwo, kbo = jax.random.split(key, 5)

    x = jax.random.normal(kx, (batch, channels, height, width), jnp.float32)

    # Parameters stored as (in, out) so the math is x @ W + b (matches Linear).
    bound = 1.0 / np.sqrt(channels)
    w_qkv = jax.random.uniform(kwq, (channels, 3 * channels), jnp.float32, -bound, bound)
    b_qkv = jax.random.uniform(kbq, (3 * channels,), jnp.float32, -bound, bound)
    w_o = jax.random.uniform(kwo, (channels, channels), jnp.float32, -bound, bound)
    b_o = jax.random.uniform(kbo, (channels,), jnp.float32, -bound, bound)

    # One-time weight prep (transpose / scale-fold / bf16 cast), hoisted out of
    # the forward call per the performance review.
    params = prepare_self_attention_params(w_qkv, b_qkv, w_o, b_o,
                                           channels=channels, num_heads=num_heads)
    params = jax.tree_util.tree_map(jax.block_until_ready, params)

    out = self_attention_2d(x, params, num_heads=num_heads)
    out = jax.block_until_ready(out)

    ref = _reference(x, w_qkv, b_qkv, w_o, b_o, num_heads=num_heads)
    assert out.shape == (batch, channels, height, width)
    # bf16 MXU operands and (on v6e/v7x) bf16 exp, with f32 accumulation:
    # intentional few-percent deviation vs the f32 reference.
    np.testing.assert_allclose(np.asarray(out), np.asarray(ref),
                               rtol=4e-2, atol=4e-2)

    print("KERNEL_OK")
</pallas_src>

<mosaic_0001>
module attributes {stable_mosaic.version = 11 : i64} {
  func.func @_self_attention_kernel(%arg0: i32, %arg1: memref<1x32x64xbf16, #tpu.memory_space<vmem>>, %arg2: memref<96x32xbf16, #tpu.memory_space<vmem>>, %arg3: memref<96x1xf32, #tpu.memory_space<vmem>>, %arg4: memref<32x32xbf16, #tpu.memory_space<vmem>>, %arg5: memref<32x1xf32, #tpu.memory_space<vmem>>, %arg6: memref<1x32x64xf32, #tpu.memory_space<vmem>>, %arg7: memref<32x64xf32, #tpu.memory_space<vmem>>) attributes {dimension_semantics = [#tpu.dimension_semantics<parallel>], iteration_bounds = array<i64: 2>, scalar_prefetch = 0 : i64, scratch_operands = 1 : i64, tpu.core_type = #tpu.core_type<tc>, window_params = [{transform_indices = @transform_0, window_bounds = array<i64: 1, 32, 64>}, {pipeline_mode = #tpu.pipeline_mode<synchronous>, transform_indices = @transform_1, window_bounds = array<i64: 96, 32>}, {pipeline_mode = #tpu.pipeline_mode<synchronous>, transform_indices = @transform_2, window_bounds = array<i64: 96, 1>}, {pipeline_mode = #tpu.pipeline_mode<synchronous>, transform_indices = @transform_3, window_bounds = array<i64: 32, 32>}, {pipeline_mode = #tpu.pipeline_mode<synchronous>, transform_indices = @transform_4, window_bounds = array<i64: 32, 1>}, {transform_indices = @transform_5, window_bounds = array<i64: 1, 32, 64>}]} {
    %c0 = arith.constant 0 : index
    %c0_0 = arith.constant 0 : index
    %0 = vector.load %arg2[%c0, %c0_0] : memref<96x32xbf16, #tpu.memory_space<vmem>>, vector<96x32xbf16>
    %c0_1 = arith.constant 0 : index
    %c0_2 = arith.constant 0 : index
    %1 = vector.load %arg3[%c0_1, %c0_2] : memref<96x1xf32, #tpu.memory_space<vmem>>, vector<96x1xf32>
    %c0_3 = arith.constant 0 : index
    %c0_4 = arith.constant 0 : index
    %2 = vector.load %arg4[%c0_3, %c0_4] : memref<32x32xbf16, #tpu.memory_space<vmem>>, vector<32x32xbf16>
    %c0_5 = arith.constant 0 : index
    %c0_6 = arith.constant 0 : index
    %3 = vector.load %arg5[%c0_5, %c0_6] : memref<32x1xf32, #tpu.memory_space<vmem>>, vector<32x1xf32>
    %c0_7 = arith.constant 0 : index
    %c0_8 = arith.constant 0 : index
    %c0_9 = arith.constant 0 : index
    %4 = vector.load %arg1[%c0_7, %c0_8, %c0_9] : memref<1x32x64xbf16, #tpu.memory_space<vmem>>, vector<1x32x64xbf16>
    %5 = vector.shape_cast %4 : vector<1x32x64xbf16> to vector<32x64xbf16>
    %cst = arith.constant dense<0.000000e+00> : vector<96x64xf32>
    %6 = tpu.matmul %0, %5, %cst {dimension_numbers = #tpu.dot_dimension_numbers<[1], [0], [0], [1], [0, 0, 1, 1], [], []>} : vector<96x32xbf16>, vector<32x64xbf16>, vector<96x64xf32> -> vector<96x64xf32>
    %7 = vector.broadcast %1 : vector<96x1xf32> to vector<96x64xf32>
    %8 = arith.addf %6, %7 : vector<96x64xf32>
    %9 = vector.extract_strided_slice %8 {offsets = [0, 0], sizes = [8, 64], strides = [1, 1]} : vector<96x64xf32> to vector<8x64xf32>
    %10 = arith.truncf %9 : vector<8x64xf32> to vector<8x64xbf16>
    %11 = vector.extract_strided_slice %8 {offsets = [32, 0], sizes = [8, 64], strides = [1, 1]} : vector<96x64xf32> to vector<8x64xf32>
    %12 = tpu.transpose %11, [1, 0] : vector<8x64xf32> -> vector<64x8xf32>
    %13 = arith.truncf %12 : vector<64x8xf32> to vector<64x8xbf16>
    %14 = vector.extract_strided_slice %8 {offsets = [64, 0], sizes = [8, 64], strides = [1, 1]} : vector<96x64xf32> to vector<8x64xf32>
    %15 = arith.truncf %14 : vector<8x64xf32> to vector<8x64xbf16>
    %cst_10 = arith.constant dense<0.000000e+00> : vector<64x64xf32>
    %16 = tpu.matmul %13, %10, %cst_10 {dimension_numbers = #tpu.dot_dimension_numbers<[1], [0], [0], [1], [0, 0, 1, 1], [], []>} : vector<64x8xbf16>, vector<8x64xbf16>, vector<64x64xf32> -> vector<64x64xf32>
    %cst_11 = arith.constant dense<0xFF800000> : vector<64xf32>
    %17 = vector.multi_reduction <maximumf>, %16, %cst_11 [0] : vector<64x64xf32> to vector<64xf32>
    %18 = vector.shape_cast %17 : vector<64xf32> to vector<1x64xf32>
    %19 = vector.broadcast %18 : vector<1x64xf32> to vector<64x64xf32>
    %20 = arith.subf %16, %19 : vector<64x64xf32>
    %21 = arith.truncf %20 : vector<64x64xf32> to vector<64x64xbf16>
    %22 = math.exp %21 : vector<64x64xbf16>
    %23 = arith.extf %22 : vector<64x64xbf16> to vector<64x64xf32>
    %cst_12 = arith.constant dense<0.000000e+00> : vector<64xf32>
    %24 = vector.multi_reduction <add>, %23, %cst_12 [0] : vector<64x64xf32> to vector<64xf32>
    %25 = vector.shape_cast %24 : vector<64xf32> to vector<1x64xf32>
    %cst_13 = arith.constant dense<0.000000e+00> : vector<8x64xf32>
    %26 = tpu.matmul %15, %22, %cst_13 {dimension_numbers = #tpu.dot_dimension_numbers<[1], [0], [0], [1], [0, 0, 1, 1], [], []>} : vector<8x64xbf16>, vector<64x64xbf16>, vector<8x64xf32> -> vector<8x64xf32>
    %27 = tpu.reciprocal %25 {approx = true} : vector<1x64xf32> -> vector<1x64xf32>
    %28 = vector.broadcast %27 : vector<1x64xf32> to vector<8x64xf32>
    %29 = arith.mulf %26, %28 : vector<8x64xf32>
    %c0_14 = arith.constant 0 : index
    %c0_15 = arith.constant 0 : index
    %30 = vector.load %arg7[%c0_14, %c0_15] : memref<32x64xf32, #tpu.memory_space<vmem>>, vector<8x64xf32>
    tpu.vector_store %arg7[%c0_14, %c0_15], %29 {strides = array<i32>} : memref<32x64xf32, #tpu.memory_space<vmem>>, vector<8x64xf32>,
    %31 = vector.extract_strided_slice %8 {offsets = [8, 0], sizes = [8, 64], strides = [1, 1]} : vector<96x64xf32> to vector<8x64xf32>
    %32 = arith.truncf %31 : vector<8x64xf32> to vector<8x64xbf16>
    %33 = vector.extract_strided_slice %8 {offsets = [40, 0], sizes = [8, 64], strides = [1, 1]} : vector<96x64xf32> to vector<8x64xf32>
    %34 = tpu.transpose %33, [1, 0] : vector<8x64xf32> -> vector<64x8xf32>
    %35 = arith.truncf %34 : vector<64x8xf32> to vector<64x8xbf16>
    %36 = vector.extract_strided_slice %8 {offsets = [72, 0], sizes = [8, 64], strides = [1, 1]} : vector<96x64xf32> to vector<8x64xf32>
    %37 = arith.truncf %36 : vector<8x64xf32> to vector<8x64xbf16>
    %cst_16 = arith.constant dense<0.000000e+00> : vector<64x64xf32>
    %38 = tpu.matmul %35, %32, %cst_16 {dimension_numbers = #tpu.dot_dimension_numbers<[1], [0], [0], [1], [0, 0, 1, 1], [], []>} : vector<64x8xbf16>, vector<8x64xbf16>, vector<64x64xf32> -> vector<64x64xf32>
    %cst_17 = arith.constant dense<0xFF800000> : vector<64xf32>
    %39 = vector.multi_reduction <maximumf>, %38, %cst_17 [0] : vector<64x64xf32> to vector<64xf32>
    %40 = vector.shape_cast %39 : vector<64xf32> to vector<1x64xf32>
    %41 = vector.broadcast %40 : vector<1x64xf32> to vector<64x64xf32>
    %42 = arith.subf %38, %41 : vector<64x64xf32>
    %43 = arith.truncf %42 : vector<64x64xf32> to vector<64x64xbf16>
    %44 = math.exp %43 : vector<64x64xbf16>
    %45 = arith.extf %44 : vector<64x64xbf16> to vector<64x64xf32>
    %cst_18 = arith.constant dense<0.000000e+00> : vector<64xf32>
    %46 = vector.multi_reduction <add>, %45, %cst_18 [0] : vector<64x64xf32> to vector<64xf32>
    %47 = vector.shape_cast %46 : vector<64xf32> to vector<1x64xf32>
    %cst_19 = arith.constant dense<0.000000e+00> : vector<8x64xf32>
    %48 = tpu.matmul %37, %44, %cst_19 {dimension_numbers = #tpu.dot_dimension_numbers<[1], [0], [0], [1], [0, 0, 1, 1], [], []>} : vector<8x64xbf16>, vector<64x64xbf16>, vector<8x64xf32> -> vector<8x64xf32>
    %49 = tpu.reciprocal %47 {approx = true} : vector<1x64xf32> -> vector<1x64xf32>
    %50 = vector.broadcast %49 : vector<1x64xf32> to vector<8x64xf32>
    %51 = arith.mulf %48, %50 : vector<8x64xf32>
    %c8 = arith.constant 8 : index
    %c0_20 = arith.constant 0 : index
    %52 = vector.load %arg7[%c8, %c0_20] : memref<32x64xf32, #tpu.memory_space<vmem>>, vector<8x64xf32>
    tpu.vector_store %arg7[%c8, %c0_20], %51 {strides = array<i32>} : memref<32x64xf32, #tpu.memory_space<vmem>>, vector<8x64xf32>,
    %53 = vector.extract_strided_slice %8 {offsets = [16, 0], sizes = [8, 64], strides = [1, 1]} : vector<96x64xf32> to vector<8x64xf32>
    %54 = arith.truncf %53 : vector<8x64xf32> to vector<8x64xbf16>
    %55 = vector.extract_strided_slice %8 {offsets = [48, 0], sizes = [8, 64], strides = [1, 1]} : vector<96x64xf32> to vector<8x64xf32>
    %56 = tpu.transpose %55, [1, 0] : vector<8x64xf32> -> vector<64x8xf32>
    %57 = arith.truncf %56 : vector<64x8xf32> to vector<64x8xbf16>
    %58 = vector.extract_strided_slice %8 {offsets = [80, 0], sizes = [8, 64], strides = [1, 1]} : vector<96x64xf32> to vector<8x64xf32>
    %59 = arith.truncf %58 : vector<8x64xf32> to vector<8x64xbf16>
    %cst_21 = arith.constant dense<0.000000e+00> : vector<64x64xf32>
    %60 = tpu.matmul %57, %54, %cst_21 {dimension_numbers = #tpu.dot_dimension_numbers<[1], [0], [0], [1], [0, 0, 1, 1], [], []>} : vector<64x8xbf16>, vector<8x64xbf16>, vector<64x64xf32> -> vector<64x64xf32>
    %cst_22 = arith.constant dense<0xFF800000> : vector<64xf32>
    %61 = vector.multi_reduction <maximumf>, %60, %cst_22 [0] : vector<64x64xf32> to vector<64xf32>
    %62 = vector.shape_cast %61 : vector<64xf32> to vector<1x64xf32>
    %63 = vector.broadcast %62 : vector<1x64xf32> to vector<64x64xf32>
    %64 = arith.subf %60, %63 : vector<64x64xf32>
    %65 = arith.truncf %64 : vector<64x64xf32> to vector<64x64xbf16>
    %66 = math.exp %65 : vector<64x64xbf16>
    %67 = arith.extf %66 : vector<64x64xbf16> to vector<64x64xf32>
    %cst_23 = arith.constant dense<0.000000e+00> : vector<64xf32>
    %68 = vector.multi_reduction <add>, %67, %cst_23 [0] : vector<64x64xf32> to vector<64xf32>
    %69 = vector.shape_cast %68 : vector<64xf32> to vector<1x64xf32>
    %cst_24 = arith.constant dense<0.000000e+00> : vector<8x64xf32>
    %70 = tpu.matmul %59, %66, %cst_24 {dimension_numbers = #tpu.dot_dimension_numbers<[1], [0], [0], [1], [0, 0, 1, 1], [], []>} : vector<8x64xbf16>, vector<64x64xbf16>, vector<8x64xf32> -> vector<8x64xf32>
    %71 = tpu.reciprocal %69 {approx = true} : vector<1x64xf32> -> vector<1x64xf32>
    %72 = vector.broadcast %71 : vector<1x64xf32> to vector<8x64xf32>
    %73 = arith.mulf %70, %72 : vector<8x64xf32>
    %c16 = arith.constant 16 : index
    %c0_25 = arith.constant 0 : index
    %74 = vector.load %arg7[%c16, %c0_25] : memref<32x64xf32, #tpu.memory_space<vmem>>, vector<8x64xf32>
    tpu.vector_store %arg7[%c16, %c0_25], %73 {strides = array<i32>} : memref<32x64xf32, #tpu.memory_space<vmem>>, vector<8x64xf32>,
    %75 = vector.extract_strided_slice %8 {offsets = [24, 0], sizes = [8, 64], strides = [1, 1]} : vector<96x64xf32> to vector<8x64xf32>
    %76 = arith.truncf %75 : vector<8x64xf32> to vector<8x64xbf16>
    %77 = vector.extract_strided_slice %8 {offsets = [56, 0], sizes = [8, 64], strides = [1, 1]} : vector<96x64xf32> to vector<8x64xf32>
    %78 = tpu.transpose %77, [1, 0] : vector<8x64xf32> -> vector<64x8xf32>
    %79 = arith.truncf %78 : vector<64x8xf32> to vector<64x8xbf16>
    %80 = vector.extract_strided_slice %8 {offsets = [88, 0], sizes = [8, 64], strides = [1, 1]} : vector<96x64xf32> to vector<8x64xf32>
    %81 = arith.truncf %80 : vector<8x64xf32> to vector<8x64xbf16>
    %cst_26 = arith.constant dense<0.000000e+00> : vector<64x64xf32>
    %82 = tpu.matmul %79, %76, %cst_26 {dimension_numbers = #tpu.dot_dimension_numbers<[1], [0], [0], [1], [0, 0, 1, 1], [], []>} : vector<64x8xbf16>, vector<8x64xbf16>, vector<64x64xf32> -> vector<64x64xf32>
    %cst_27 = arith.constant dense<0xFF800000> : vector<64xf32>
    %83 = vector.multi_reduction <maximumf>, %82, %cst_27 [0] : vector<64x64xf32> to vector<64xf32>
    %84 = vector.shape_cast %83 : vector<64xf32> to vector<1x64xf32>
    %85 = vector.broadcast %84 : vector<1x64xf32> to vector<64x64xf32>
    %86 = arith.subf %82, %85 : vector<64x64xf32>
    %87 = arith.truncf %86 : vector<64x64xf32> to vector<64x64xbf16>
    %88 = math.exp %87 : vector<64x64xbf16>
    %89 = arith.extf %88 : vector<64x64xbf16> to vector<64x64xf32>
    %cst_28 = arith.constant dense<0.000000e+00> : vector<64xf32>
    %90 = vector.multi_reduction <add>, %89, %cst_28 [0] : vector<64x64xf32> to vector<64xf32>
    %91 = vector.shape_cast %90 : vector<64xf32> to vector<1x64xf32>
    %cst_29 = arith.constant dense<0.000000e+00> : vector<8x64xf32>
    %92 = tpu.matmul %81, %88, %cst_29 {dimension_numbers = #tpu.dot_dimension_numbers<[1], [0], [0], [1], [0, 0, 1, 1], [], []>} : vector<8x64xbf16>, vector<64x64xbf16>, vector<8x64xf32> -> vector<8x64xf32>
    %93 = tpu.reciprocal %91 {approx = true} : vector<1x64xf32> -> vector<1x64xf32>
    %94 = vector.broadcast %93 : vector<1x64xf32> to vector<8x64xf32>
    %95 = arith.mulf %92, %94 : vector<8x64xf32>
    %c24 = arith.constant 24 : index
    %c0_30 = arith.constant 0 : index
    %96 = vector.load %arg7[%c24, %c0_30] : memref<32x64xf32, #tpu.memory_space<vmem>>, vector<8x64xf32>
    tpu.vector_store %arg7[%c24, %c0_30], %95 {strides = array<i32>} : memref<32x64xf32, #tpu.memory_space<vmem>>, vector<8x64xf32>,
    %c0_31 = arith.constant 0 : index
    %c0_32 = arith.constant 0 : index
    %97 = vector.load %arg7[%c0_31, %c0_32] : memref<32x64xf32, #tpu.memory_space<vmem>>, vector<32x64xf32>
    %98 = arith.truncf %97 : vector<32x64xf32> to vector<32x64xbf16>
    %cst_33 = arith.constant dense<0.000000e+00> : vector<32x64xf32>
    %99 = tpu.matmul %2, %98, %cst_33 {dimension_numbers = #tpu.dot_dimension_numbers<[1], [0], [0], [1], [0, 0, 1, 1], [], []>} : vector<32x32xbf16>, vector<32x64xbf16>, vector<32x64xf32> -> vector<32x64xf32>
    %100 = vector.broadcast %3 : vector<32x1xf32> to vector<32x64xf32>
    %101 = arith.addf %99, %100 : vector<32x64xf32>
    %c0_34 = arith.constant 0 : index
    %c0_35 = arith.constant 0 : index
    %c0_36 = arith.constant 0 : index
    %102 = vector.load %arg6[%c0_34, %c0_35, %c0_36] : memref<1x32x64xf32, #tpu.memory_space<vmem>>, vector<1x32x64xf32>
    %103 = vector.shape_cast %102 : vector<1x32x64xf32> to vector<32x64xf32>
    %104 = vector.shape_cast %101 : vector<32x64xf32> to vector<1x32x64xf32>
    tpu.vector_store %arg6[%c0_34, %c0_35, %c0_36], %104 {strides = array<i32>} : memref<1x32x64xf32, #tpu.memory_space<vmem>>, vector<1x32x64xf32>,
    return
  }
  func.func @transform_0(%arg0: i32) -> (i32, i32, i32) {
    %c0_i32 = arith.constant 0 : i32
    %c0_i32_0 = arith.constant 0 : i32
    %c0_i32_1 = arith.constant 0 : i32
    return %arg0, %c0_i32, %c0_i32_0 : i32, i32, i32
  }
  func.func @transform_1(%arg0: i32) -> (i32, i32) {
    %c0_i32 = arith.constant 0 : i32
    %c0_i32_0 = arith.constant 0 : i32
    %c0_i32_1 = arith.constant 0 : i32
    return %c0_i32, %c0_i32_0 : i32, i32
  }
  func.func @transform_2(%arg0: i32) -> (i32, i32) {
    %c0_i32 = arith.constant 0 : i32
    %c0_i32_0 = arith.constant 0 : i32
    %c0_i32_1 = arith.constant 0 : i32
    return %c0_i32, %c0_i32_0 : i32, i32
  }
  func.func @transform_3(%arg0: i32) -> (i32, i32) {
    %c0_i32 = arith.constant 0 : i32
    %c0_i32_0 = arith.constant 0 : i32
    %c0_i32_1 = arith.constant 0 : i32
    return %c0_i32, %c0_i32_0 : i32, i32
  }
  func.func @transform_4(%arg0: i32) -> (i32, i32) {
    %c0_i32 = arith.constant 0 : i32
    %c0_i32_0 = arith.constant 0 : i32
    %c0_i32_1 = arith.constant 0 : i32
    return %c0_i32, %c0_i32_0 : i32, i32
  }
  func.func @transform_5(%arg0: i32) -> (i32, i32, i32) {
    %c0_i32 = arith.constant 0 : i32
    %c0_i32_0 = arith.constant 0 : i32
    %c0_i32_1 = arith.constant 0 : i32
    return %arg0, %c0_i32, %c0_i32_0 : i32, i32, i32
  }
}

</mosaic_0001>

<llo_original>
// kernel: tpu_custom_call.1
$region0: #{tpu_custom_call.1}
  #allocation0 [shape = 'u32[]', space=smem, size = 0x4, offset = 0x4, fixed_abs, tag = 'smem constant byte address 0x4 - core index']
  #allocation1 [shape = 'u32[144,128]{1,0:T(1,128)}', space=vmem, size = 0x12000, scoped, tag = 'internal scratch']
  #allocation2 [shape = 'f32[32,64]{1,0:T(8,128)}', space=vmem, size = 0x4000, scoped, tag = 'scratch operand']
  %s0 = inlined_call_operand.vmem [shape: bf16[2,32,64], index: 0, kind: input, shape index: {}]
  %s1 = inlined_call_operand.vmem [shape: bf16[96,32], index: 1, kind: input, shape index: {}]
  %s2 = inlined_call_operand.vmem [shape: f32[96,1], index: 2, kind: input, shape index: {}]
  %s3 = inlined_call_operand.vmem [shape: bf16[32,32], index: 3, kind: input, shape index: {}]
  %s4 = inlined_call_operand.vmem [shape: f32[32,1], index: 4, kind: input, shape index: {}]
  %s5 = inlined_call_operand.hbm [shape: f32[2,32,64], index: 5, kind: output, shape index: {}]
  %s6 = sld [smem:[#allocation0]]
  $region53: #{tpu_custom_call.1} parent=0
    _
  %s8 = ssub.s32 1, %s6
  %s9 = scalar_select 0, %s8, %s6
  $region1: #{tpu_custom_call.1} parent=0
    #allocation3 [shape = 'u8[32768]{0}', space=vmem, size = 0x8000, scoped, tag = 'output window, operand 0']
    #allocation4 [shape = 's32[2]{0}', space=sflag, size = 0x8, scoped, tag = 'scoped memory for tpu_custom_call.1']
    %10 = vsyncpa [#allocation4], 0
    %s11 = scalar_lea.sflag [#allocation4], 1
    %12 = vsyncpa %s11, 0
    loop: start=0, step=1, limit=4
    $region2: #{tpu_custom_call.1} parent=1 // loop_pre_header
      _
    $region3: #{tpu_custom_call.1} parent=1 // loop_header
      %s14 = sphi 0, %s18
      %p15 = scmp.ge.s32.totalorder %s14, 4
      %s24 = sphi 0, %s26
      %s27 = sphi 0, %s24
      %s28 = sphi 0, %s27
      %s44 = sphi 0, %s28
      %s48 = sphi 0, %s48
      %s50 = sphi 0, %s48
      %s51 = sphi 0, %s50
      %s65 = sphi 0, %s51
      %s69 = sphi 0, %s69
      %s71 = sphi 0, %s69
      %s72 = sphi 0, %s71
      %s86 = sphi 0, %s72
      %s90 = sphi 0, %s90
      %s92 = sphi 0, %s90
      %s93 = sphi 0, %s92
      %s107 = sphi 0, %s93
      %s111 = sphi 0, %s111
      %s113 = sphi 0, %s111
      %s114 = sphi 0, %s113
      %s128 = sphi 0, %s114
      %s134 = sphi 0, %s136
      %s137 = sphi 0, %s134
      %s138 = sphi 0, %s137
      %s154 = sphi 0, %s138
    $region4: #{tpu_custom_call.1} parent=1 // loop_header_branch
      %17 = sbr.rel (%p15) target = $region8
    $region5: #{tpu_custom_call.1} parent=1 // loop_body
      %s19 = ssub.s32 %s14, 1
      %s20 = ssub.s32 %s14, 2
      %s21 = sadd.s32 %s14, 1
      %s22 = ssub.s32 %s14, %s21
      %p23 = scmp.eq.s32.totalorder %s22, 0
      %s25 = sadd.s32 %s24, 1
      %s26 = scalar_select %p23, %s24, %s25
      %p29 = pneg %p23
      %p30 = scmp.eq.s32.totalorder %s14, 1
      %p31 = por %p29, %p30
      %p32 = scmp.ne.s32.totalorder %s24, %s27
      %p33 = scmp.eq.s32.totalorder %s14, 0
      %p34 = por %p32, %p33
      %p35 = scmp.ne.s32.totalorder %s24, %s27
      %p36 = scmp.eq.s32.totalorder %s19, 1
      %p37 = por %p35, %p36
      %p38 = scmp.ne.s32.totalorder %s27, %s28
      %p39 = scmp.eq.s32.totalorder %s19, 0
      %p40 = por %p38, %p39
      %p41 = scmp.ne.s32.totalorder %s27, %s28
      %p42 = scmp.eq.s32.totalorder %s20, 1
      %p43 = por %p41, %p42
      %p45 = scmp.ne.s32.totalorder %s28, %s44
      %p46 = scmp.eq.s32.totalorder %s20, 0
      %p47 = por %p45, %p46
      %s49 = sadd.s32 %s48, 1
      %p52 = scmp.eq.s32.totalorder %s14, 1
      %p53 = scmp.ne.s32.totalorder %s48, %s50
      %p54 = scmp.eq.s32.totalorder %s14, 0
      %p55 = por %p53, %p54
      %p56 = scmp.ne.s32.totalorder %s48, %s50
      %p57 = scmp.eq.s32.totalorder %s19, 1
      %p58 = por %p56, %p57
      %p59 = scmp.ne.s32.totalorder %s50, %s51
      %p60 = scmp.eq.s32.totalorder %s19, 0
      %p61 = por %p59, %p60
      %p62 = scmp.ne.s32.totalorder %s50, %s51
      %p63 = scmp.eq.s32.totalorder %s20, 1
      %p64 = por %p62, %p63
      %p66 = scmp.ne.s32.totalorder %s51, %s65
      %p67 = scmp.eq.s32.totalorder %s20, 0
      %p68 = por %p66, %p67
      %s70 = sadd.s32 %s69, 1
      %p73 = scmp.eq.s32.totalorder %s14, 1
      %p74 = scmp.ne.s32.totalorder %s69, %s71
      %p75 = scmp.eq.s32.totalorder %s14, 0
      %p76 = por %p74, %p75
      %p77 = scmp.ne.s32.totalorder %s69, %s71
      %p78 = scmp.eq.s32.totalorder %s19, 1
      %p79 = por %p77, %p78
      %p80 = scmp.ne.s32.totalorder %s71, %s72
      %p81 = scmp.eq.s32.totalorder %s19, 0
      %p82 = por %p80, %p81
      %p83 = scmp.ne.s32.totalorder %s71, %s72
      %p84 = scmp.eq.s32.totalorder %s20, 1
      %p85 = por %p83, %p84
      %p87 = scmp.ne.s32.totalorder %s72, %s86
      %p88 = scmp.eq.s32.totalorder %s20, 0
      %p89 = por %p87, %p88
      %s91 = sadd.s32 %s90, 1
      %p94 = scmp.eq.s32.totalorder %s14, 1
      %p95 = scmp.ne.s32.totalorder %s90, %s92
      %p96 = scmp.eq.s32.totalorder %s14, 0
      %p97 = por %p95, %p96
      %p98 = scmp.ne.s32.totalorder %s90, %s92
      %p99 = scmp.eq.s32.totalorder %s19, 1
      %p100 = por %p98, %p99
      %p101 = scmp.ne.s32.totalorder %s92, %s93
      %p102 = scmp.eq.s32.totalorder %s19, 0
      %p103 = por %p101, %p102
      %p104 = scmp.ne.s32.totalorder %s92, %s93
      %p105 = scmp.eq.s32.totalorder %s20, 1
      %p106 = por %p104, %p105
      %p108 = scmp.ne.s32.totalorder %s93, %s107
      %p109 = scmp.eq.s32.totalorder %s20, 0
      %p110 = por %p108, %p109
      %s112 = sadd.s32 %s111, 1
      %p115 = scmp.eq.s32.totalorder %s14, 1
      %p116 = scmp.ne.s32.totalorder %s111, %s113
      %p117 = scmp.eq.s32.totalorder %s14, 0
      %p118 = por %p116, %p117
      %p119 = scmp.ne.s32.totalorder %s111, %s113
      %p120 = scmp.eq.s32.totalorder %s19, 1
      %p121 = por %p119, %p120
      %p122 = scmp.ne.s32.totalorder %s113, %s114
      %p123 = scmp.eq.s32.totalorder %s19, 0
      %p124 = por %p122, %p123
      %p125 = scmp.ne.s32.totalorder %s113, %s114
      %p126 = scmp.eq.s32.totalorder %s20, 1
      %p127 = por %p125, %p126
      %p129 = scmp.ne.s32.totalorder %s114, %s128
      %p130 = scmp.eq.s32.totalorder %s20, 0
      %p131 = por %p129, %p130
      %s132 = ssub.s32 %s14, %s21
      %p133 = scmp.eq.s32.totalorder %s132, 0
      %s135 = sadd.s32 %s134, 1
      %s136 = scalar_select %p133, %s134, %s135
      %p139 = pneg %p133
      %p140 = scmp.eq.s32.totalorder %s14, 1
      %p141 = por %p139, %p140
      %p142 = scmp.ne.s32.totalorder %s134, %s137
      %p143 = scmp.eq.s32.totalorder %s14, 0
      %p144 = por %p142, %p143
      %p145 = scmp.ne.s32.totalorder %s134, %s137
      %p146 = scmp.eq.s32.totalorder %s19, 1
      %p147 = por %p145, %p146
      %p148 = scmp.ne.s32.totalorder %s137, %s138
      %p149 = scmp.eq.s32.totalorder %s19, 0
      %p150 = por %p148, %p149
      %p151 = scmp.ne.s32.totalorder %s137, %s138
      %p152 = scmp.eq.s32.totalorder %s20, 1
      %p153 = por %p151, %p152
      %p155 = scmp.ne.s32.totalorder %s138, %s154
      %p156 = scmp.eq.s32.totalorder %s20, 0
      %p157 = por %p155, %p156
      %p158 = scmp.le.s32.totalorder 1, %s14
      %p159 = scmp.lt.s32.totalorder %s14, 3
      %p160 = pnand %p158, %p159
      %p161 = pneg %p160
      // Predicated region
      $region9: #{tpu_custom_call.1} parent=5 // pred_check
        _
      $region10: #{tpu_custom_call.1} parent=5 // pred_check_branch
        %163 = sbr.rel (%p160) target = $region12
      $region11: #{tpu_custom_call.1} parent=5 // pred_region
        %s164 = ssub.s32 %s14, 1
        // Predicated region
        $region13: #{tpu_custom_call.1} parent=11 // pred_check
          %p165 = pneg %p61
        $region14: #{tpu_custom_call.1} parent=11 // pred_check_branch
          %167 = sbr.rel (%p165) target = $region16
        $region15: #{tpu_custom_call.1} parent=11 // pred_region
          _
        $region16: #{tpu_custom_call.1} parent=11 // pred_fallthru
          _
        // Predicated region
        $region17: #{tpu_custom_call.1} parent=11 // pred_check
          %p168 = pneg %p82
        $region18: #{tpu_custom_call.1} parent=11 // pred_check_branch
          %170 = sbr.rel (%p168) target = $region20
        $region19: #{tpu_custom_call.1} parent=11 // pred_region
          _
        $region20: #{tpu_custom_call.1} parent=11 // pred_fallthru
          _
        // Predicated region
        $region21: #{tpu_custom_call.1} parent=11 // pred_check
          %p171 = pneg %p103
        $region22: #{tpu_custom_call.1} parent=11 // pred_check_branch
          %173 = sbr.rel (%p171) target = $region24
        $region23: #{tpu_custom_call.1} parent=11 // pred_region
          _
        $region24: #{tpu_custom_call.1} parent=11 // pred_fallthru
          _
        // Predicated region
        $region25: #{tpu_custom_call.1} parent=11 // pred_check
          %p174 = pneg %p124
        $region26: #{tpu_custom_call.1} parent=11 // pred_check_branch
          %176 = sbr.rel (%p174) target = $region28
        $region27: #{tpu_custom_call.1} parent=11 // pred_region
          _
        $region28: #{tpu_custom_call.1} parent=11 // pred_fallthru
          _
      $region12: #{tpu_custom_call.1} parent=5 // pred_fallthru
        _
      %p177 = scmp.lt.s32.totalorder %s14, 2
      // Predicated region
      $region29: #{tpu_custom_call.1} parent=5 // pred_check
        %p178 = pneg %p177
      $region30: #{tpu_custom_call.1} parent=5 // pred_check_branch
        %180 = sbr.rel (%p178) target = $region32
      $region31: #{tpu_custom_call.1} parent=5 // pred_region
        // Predicated region
        $region33: #{tpu_custom_call.1} parent=31 // pred_check
          %p181 = pneg %p34
        $region34: #{tpu_custom_call.1} parent=31 // pred_check_branch
          %183 = sbr.rel (%p181) target = $region36
        $region35: #{tpu_custom_call.1} parent=31 // pred_region
          %p184 = scmp.lt.s32.totalorder %s14, 1
          %s185 = scalar_select %p184, %s14, 1
          %s186 = smul.addr %s185, 4
          %s187 = smul.addr %s186, 4
          %s188 = scalar_lea.vmem %s0, %s187
        $region36: #{tpu_custom_call.1} parent=31 // pred_fallthru
          _
      $region32: #{tpu_custom_call.1} parent=5 // pred_fallthru
        _
      %p189 = scmp.le.s32.totalorder 1, %s14
      %p190 = scmp.lt.s32.totalorder %s14, 3
      %p191 = pnand %p189, %p190
      %p192 = pneg %p191
      // Predicated region
      $region37: #{tpu_custom_call.1} parent=5 // pred_check
        _
      $region38: #{tpu_custom_call.1} parent=5 // pred_check_branch
        %194 = sbr.rel (%p191) target = $region40
      $region39: #{tpu_custom_call.1} parent=5 // pred_region
        %s195 = ssub.s32 %s14, 1
        %p196 = scmp.lt.s32.totalorder %s19, 1
        %s197 = scalar_select %p196, %s19, 1
        %s198 = smul.addr %s197, 4
        %s199 = smul.addr %s198, 4
        %s200 = scalar_lea.vmem %s0, %s199
        %p201 = pneg %p40
        %p202 = pneg %p37
        %p203 = pneg %p61
        %p204 = pneg %p58
        %p205 = pneg %p82
        %p206 = pneg %p79
        %p207 = pneg %p103
        %p208 = pneg %p100
        %p209 = pneg %p124
        %p210 = pneg %p121
        %p211 = pneg %p150
        %p212 = pneg %p147
        %s213 = sand.u32 %s137, 1
        %s214 = scalar_lea.sflag [#allocation4], %s213
        %s215 = sand.u32 %s137, 1
        %s216 = smul.addr %s215, 32
        %s217 = scalar_lea.vmem [#allocation3], %s216
        %p218 = scmp.lt.s32.totalorder %s19, 1
        %s219 = scalar_select %p218, %s19, 1
        %s220 = smul.addr %s219, 4
        %s221 = smul.addr %s220, 4
        %s222 = scalar_lea.vmem %s0, %s221
        %v224 = vld [vmem:[%s1] sm:$0xf]
        %v225 = vld [vmem:[%s1 + $0x4] sm:$0xf]
        %v226 = vld [vmem:[%s1 + $0x8] sm:$0xf]
        %v227 = vld [vmem:[%s1 + $0xc] sm:$0xf]
        %v228 = vld [vmem:[%s1 + $0x10] sm:$0xf]
        %v229 = vld [vmem:[%s1 + $0x14] sm:$0xf]
        %v230 = vld [vmem:[%s1 + $0x18] sm:$0xf]
        %v231 = vld [vmem:[%s1 + $0x1c] sm:$0xf]
        %v232 = vld [vmem:[%s1 + $0x20] sm:$0xf]
        %v233 = vld [vmem:[%s1 + $0x24] sm:$0xf]
        %v234 = vld [vmem:[%s1 + $0x28] sm:$0xf]
        %v235 = vld [vmem:[%s1 + $0x2c] sm:$0xf]
        %v236 = vld [vmem:[%s2] sm:$0xff]
        %v237 = vld [vmem:[%s2 + $0x8] sm:$0xff]
        %v238 = vld [vmem:[%s2 + $0x10] sm:$0xff]
        %v239 = vld [vmem:[%s2 + $0x18] sm:$0xff]
        %v240 = vld [vmem:[%s2 + $0x20] sm:$0xff]
        %v241 = vld [vmem:[%s2 + $0x28] sm:$0xff]
        %v242 = vld [vmem:[%s2 + $0x30] sm:$0xff]
        %v243 = vld [vmem:[%s2 + $0x38] sm:$0xff]
        %v244 = vld [vmem:[%s2 + $0x40] sm:$0xff]
        %v245 = vld [vmem:[%s2 + $0x48] sm:$0xff]
        %v246 = vld [vmem:[%s2 + $0x50] sm:$0xff]
        %v247 = vld [vmem:[%s2 + $0x58] sm:$0xff]
        %v248 = vld [vmem:[%s3] sm:$0xf]
        %v249 = vld [vmem:[%s3 + $0x4] sm:$0xf]
        %v250 = vld [vmem:[%s3 + $0x8] sm:$0xf]
        %v251 = vld [vmem:[%s3 + $0xc] sm:$0xf]
        %v252 = vld [vmem:[%s4] sm:$0xff]
        %v253 = vld [vmem:[%s4 + $0x8] sm:$0xff]
        %v254 = vld [vmem:[%s4 + $0x10] sm:$0xff]
        %v255 = vld [vmem:[%s4 + $0x18] sm:$0xff]
        %v256 = vld [vmem:[%s222] sm:$0xf]
        %v257 = vld [vmem:[%s222 + $0x4] sm:$0xf]
        %v258 = vld [vmem:[%s222 + $0x8] sm:$0xf]
        %v259 = vld [vmem:[%s222 + $0xc] sm:$0xf]
        %261 = vset.pattern.permute.xlu0 0
        %262 = vperm.xlu0 %261, %v236
        %v263 = vpop.permute.xlu0 %262
        %266 = vset.pattern.permute.xlu0 0
        %267 = vperm.xlu0 %266, %v237
        %v268 = vpop.permute.xlu0 %267
        %271 = vset.pattern.permute.xlu0 0
        %272 = vperm.xlu0 %271, %v238
        %v273 = vpop.permute.xlu0 %272
        %276 = vset.pattern.permute.xlu0 0
        %277 = vperm.xlu0 %276, %v239
        %v278 = vpop.permute.xlu0 %277
        %281 = vset.pattern.permute.xlu0 0
        %282 = vperm.xlu0 %281, %v240
        %v283 = vpop.permute.xlu0 %282
        %286 = vset.pattern.permute.xlu0 0
        %287 = vperm.xlu0 %286, %v241
        %v288 = vpop.permute.xlu0 %287
        %291 = vset.pattern.permute.xlu0 0
        %292 = vperm.xlu0 %291, %v242
        %v293 = vpop.permute.xlu0 %292
        %296 = vset.pattern.permute.xlu0 0
        %297 = vperm.xlu0 %296, %v243
        %v298 = vpop.permute.xlu0 %297
        %301 = vset.pattern.permute.xlu0 0
        %302 = vperm.xlu0 %301, %v244
        %v303 = vpop.permute.xlu0 %302
        %306 = vset.pattern.permute.xlu0 0
        %307 = vperm.xlu0 %306, %v245
        %v308 = vpop.permute.xlu0 %307
        %311 = vset.pattern.permute.xlu0 0
        %312 = vperm.xlu0 %311, %v246
        %v313 = vpop.permute.xlu0 %312
        %316 = vset.pattern.permute.xlu0 0
        %317 = vperm.xlu0 %316, %v247
        %v318 = vpop.permute.xlu0 %317
        %v332 = vunpack.c.l.b16 %v224
        %v333 = vunpack.c.l.b16 %v225
        %v334 = vunpack.c.l.b16 %v226
        %v335 = vunpack.c.l.b16 %v227
        %v336 = vunpack.c.l.b16 %v228
        %v337 = vunpack.c.l.b16 %v229
        %v338 = vunpack.c.l.b16 %v230
        %v339 = vunpack.c.l.b16 %v231
        %v340 = vunpack.c.l.b16 %v232
        %v341 = vunpack.c.l.b16 %v233
        %v342 = vunpack.c.l.b16 %v234
        %v343 = vunpack.c.l.b16 %v235
        %v344 = vpack.c.b16 %v333, %v332
        %v345 = vpack.c.b16 %v335, %v334
        %v346 = vpack.c.b16 %v337, %v336
        %v347 = vpack.c.b16 %v339, %v338
        %v348 = vpack.c.b16 %v341, %v340
        %v349 = vpack.c.b16 %v343, %v342
        %v354 = vunpack.c.l.b16 %v256
        %v355 = vunpack.c.l.b16 %v257
        %v356 = vunpack.c.l.b16 %v258
        %v357 = vunpack.c.l.b16 %v259
        %v358 = vpack.c.b16 %v355, %v354
        %v359 = vpack.c.b16 %v357, %v356
        %vm362 = vcmask 261120
        %v364 = vsel %vm362, %v344, 0
        %v367 = vsel %vm362, %v345, 0
        %v370 = vsel %vm362, %v346, 0
        %v373 = vsel %vm362, %v347, 0
        %v376 = vsel %vm362, %v348, 0
        %v379 = vsel %vm362, %v349, 0
        %381 = vmatprep.subr.bf16.mxu0 0
        %382 = vmatpush1.bf16.msra.mxu0 0
        %383 = vmatprep.subr.bf16.mxu0 0
        %384 = vmatpush1.bf16.msra.mxu0 0
        %385 = vmatprep.subr.bf16.mxu0 0
        %386 = vmatpush1.bf16.msra.mxu0 0
        %387 = vmatprep.subr.bf16.mxu0 0
        %388 = vmatpush1.bf16.msra.mxu0 0
        %389 = vmatprep.subr.bf16.mxu0 0
        %390 = vmatpush1.bf16.msra.mxu0 0
        %391 = vmatprep.subr.bf16.mxu0 0
        %392 = vmatpush1.bf16.msra.mxu0 0
        %393 = vmatprep.subr.bf16.mxu0 0
        %394 = vmatpush1.bf16.msra.mxu0 %v359
        %395 = vmatprep.subr.bf16.mxu0 0
        %396 = vmatpush1.bf16.msra.mxu0 %v358
        %397 = vmatprep.subr.bf16.mxu0 0
        %398 = vmatpush2.bf16.msra.mxu0 0
        %399 = vmatprep.subr.bf16.mxu0 0
        %400 = vmatpush2.bf16.msra.mxu0 0
        %401 = vmatprep.subr.bf16.mxu0 0
        %402 = vmatpush2.bf16.msra.mxu0 0
        %403 = vmatprep.subr.bf16.mxu0 0
        %404 = vmatpush2.bf16.msra.mxu0 0
        %405 = vmatprep.subr.bf16.mxu0 0
        %406 = vmatpush2.bf16.msra.mxu0 0
        %407 = vmatprep.subr.bf16.mxu0 0
        %408 = vmatpush2.bf16.msra.mxu0 0
        %409 = vmatprep.subr.bf16.mxu0 0
        %410 = vmatpush2.bf16.msra.mxu0 0
        %411 = vmatprep.subr.bf16.mxu0 0
        %412 = vmatpush2.bf16.msra.mxu0 0
        %413 = vmatprep.mubr.bf16.mxu0 0
        %414 = vmatmul.mubr.bf16.gmra.mxu0 %v364
        %v415 = vpop.f32.mrf.mxu0
        %v416 = vadd.f32 %v263, %v415
        %v417 = vpop.f32.mrf.mxu0
        %v418 = vpop.f32.mrf.mxu0
        %v419 = vadd.f32 %v268, %v418
        %v420 = vpop.f32.mrf.mxu0
        %421 = vmatprep.mubr.bf16.mxu0 0
        %422 = vmatmul.mubr.bf16.gmra.mxu0 %v367
        %v423 = vpop.f32.mrf.mxu0
        %v424 = vadd.f32 %v273, %v423
        %v425 = vpop.f32.mrf.mxu0
        %v426 = vpop.f32.mrf.mxu0
        %v427 = vadd.f32 %v278, %v426
        %v428 = vpop.f32.mrf.mxu0
        %429 = vmatprep.mubr.bf16.mxu0 0
        %430 = vmatmul.mubr.bf16.gmra.mxu0 %v370
        %v431 = vpop.f32.mrf.mxu0
        %v432 = vadd.f32 %v283, %v431
        %v433 = vpop.f32.mrf.mxu0
        %v434 = vpop.f32.mrf.mxu0
        %v435 = vadd.f32 %v288, %v434
        %v436 = vpop.f32.mrf.mxu0
        %437 = vmatprep.mubr.bf16.mxu0 0
        %438 = vmatmul.mubr.bf16.gmra.mxu0 %v373
        %v439 = vpop.f32.mrf.mxu0
        %v440 = vadd.f32 %v293, %v439
        %v441 = vpop.f32.mrf.mxu0
        %v442 = vpop.f32.mrf.mxu0
        %v443 = vadd.f32 %v298, %v442
        %v444 = vpop.f32.mrf.mxu0
        %445 = vmatprep.mubr.bf16.mxu0 0
        %446 = vmatmul.mubr.bf16.gmra.mxu0 %v376
        %v447 = vpop.f32.mrf.mxu0
        %v448 = vadd.f32 %v303, %v447
        %v449 = vpop.f32.mrf.mxu0
        %v450 = vpop.f32.mrf.mxu0
        %v451 = vadd.f32 %v308, %v450
        %v452 = vpop.f32.mrf.mxu0
        %453 = vmatprep.mubr.bf16.mxu0 0
        %454 = vmatmul.mubr.bf16.gmra.mxu0 %v379
        %v455 = vpop.f32.mrf.mxu0
        %v456 = vadd.f32 %v313, %v455
        %v457 = vpop.f32.mrf.mxu0
        %v458 = vpop.f32.mrf.mxu0
        %v459 = vadd.f32 %v318, %v458
        %v460 = vpop.f32.mrf.mxu0
        %461 = vdwg.mxu0
        %v462 = vpack.c.bf16 %v416, %v416
        %463 = vxpose.xlu0.b32.start [1/16] %v432, 128
        %464 = vxpose.xlu0.b32.cont [2/16] 0.0, 128
        %465 = vxpose.xlu0.b32.cont [3/16] 0.0, 128
        %466 = vxpose.xlu0.b32.cont [4/16] 0.0, 128
        %467 = vxpose.xlu0.b32.cont [5/16] 0.0, 128
        %468 = vxpose.xlu0.b32.cont [6/16] 0.0, 128
        %469 = vxpose.xlu0.b32.cont [7/16] 0.0, 128
        %470 = vxpose.xlu0.b32.cont [8/16] 0.0, 128
        %471 = vxpose.xlu0.b32.cont [9/16] 0.0, 128
        %472 = vxpose.xlu0.b32.cont [10/16] 0.0, 128
        %473 = vxpose.xlu0.b32.cont [11/16] 0.0, 128
        %474 = vxpose.xlu0.b32.cont [12/16] 0.0, 128
        %475 = vxpose.xlu0.b32.cont [13/16] 0.0, 128
        %476 = vxpose.xlu0.b32.cont [14/16] 0.0, 128
        %477 = vxpose.xlu0.b32.cont [15/16] 0.0, 128
        %478 = vxpose.xlu0.b32.end [16/16] 0.0, 128
        %v479 = vpop.trf.xlu0
        %v480 = vpop.trf.xlu0
        %v481 = vpop.trf.xlu0
        %v482 = vpop.trf.xlu0
        %v483 = vpop.trf.xlu0
        %v484 = vpop.trf.xlu0
        %v485 = vpop.trf.xlu0
        %v486 = vpop.trf.xlu0
        %v487 = vpop.trf.xlu0
        %v488 = vpop.trf.xlu0
        %v489 = vpop.trf.xlu0
        %v490 = vpop.trf.xlu0
        %v491 = vpop.trf.xlu0
        %v492 = vpop.trf.xlu0
        %v493 = vpop.trf.xlu0
        %v494 = vpop.trf.xlu0
        %v495 = vpack.c.bf16 %v480, %v479
        %v496 = vpack.c.bf16 %v482, %v481
        %v497 = vpack.c.bf16 %v484, %v483
        %v498 = vpack.c.bf16 %v486, %v485
        %v499 = vpack.c.bf16 %v448, %v448
        %vm500 = vcmask 64512
        %v502 = vsel %vm500, %v495, 0
        %v505 = vsel %vm500, %v496, 0
        %v508 = vsel %vm500, %v497, 0
        %v511 = vsel %vm500, %v498, 0
        %vm513 = vcmask 1043456
        %v515 = vsel %vm513, %v462, 0
        %517 = vmatprep.subr.bf16.mxu0 0
        %518 = vmatpush1.bf16.msra.mxu0 0
        %519 = vmatprep.subr.bf16.mxu0 0
        %520 = vmatpush1.bf16.msra.mxu0 0
        %521 = vmatprep.subr.bf16.mxu0 0
        %522 = vmatpush1.bf16.msra.mxu0 0
        %523 = vmatprep.subr.bf16.mxu0 0
        %524 = vmatpush1.bf16.msra.mxu0 0
        %525 = vmatprep.subr.bf16.mxu0 0
        %526 = vmatpush1.bf16.msra.mxu0 0
        %527 = vmatprep.subr.bf16.mxu0 0
        %528 = vmatpush1.bf16.msra.mxu0 0
        %529 = vmatprep.subr.bf16.mxu0 0
        %530 = vmatpush1.bf16.msra.mxu0 0
        %531 = vmatprep.subr.bf16.mxu0 0
        %532 = vmatpush1.bf16.msra.mxu0 %v515
        %533 = vmatprep.subr.bf16.mxu0 0
        %534 = vmatpush2.bf16.msra.mxu0 0
        %535 = vmatprep.subr.bf16.mxu0 0
        %536 = vmatpush2.bf16.msra.mxu0 0
        %537 = vmatprep.subr.bf16.mxu0 0
        %538 = vmatpush2.bf16.msra.mxu0 0
        %539 = vmatprep.subr.bf16.mxu0 0
        %540 = vmatpush2.bf16.msra.mxu0 0
        %541 = vmatprep.subr.bf16.mxu0 0
        %542 = vmatpush2.bf16.msra.mxu0 0
        %543 = vmatprep.subr.bf16.mxu0 0
        %544 = vmatpush2.bf16.msra.mxu0 0
        %545 = vmatprep.subr.bf16.mxu0 0
        %546 = vmatpush2.bf16.msra.mxu0 0
        %547 = vmatprep.subr.bf16.mxu0 0
        %548 = vmatpush2.bf16.msra.mxu0 0
        %549 = vmatprep.mubr.bf16.mxu0 0
        %550 = vmatmul.mubr.bf16.gmra.mxu0 %v502
        %v551 = vpop.f32.mrf.mxu0
        %v552 = vadd.f32 0.0, %v551
        %v553 = vpop.f32.mrf.mxu0
        %v554 = vpop.f32.mrf.mxu0
        %v555 = vadd.f32 0.0, %v554
        %v556 = vpop.f32.mrf.mxu0
        %557 = vmatprep.mubr.bf16.mxu0 0
        %558 = vmatmul.mubr.bf16.gmra.mxu0 %v505
        %v559 = vpop.f32.mrf.mxu0
        %v560 = vadd.f32 0.0, %v559
        %v561 = vpop.f32.mrf.mxu0
        %v562 = vpop.f32.mrf.mxu0
        %v563 = vadd.f32 0.0, %v562
        %v564 = vpop.f32.mrf.mxu0
        %565 = vmatprep.mubr.bf16.mxu0 0
        %566 = vmatmul.mubr.bf16.gmra.mxu0 %v508
        %v567 = vpop.f32.mrf.mxu0
        %v568 = vadd.f32 0.0, %v567
        %v569 = vpop.f32.mrf.mxu0
        %v570 = vpop.f32.mrf.mxu0
        %v571 = vadd.f32 0.0, %v570
        %v572 = vpop.f32.mrf.mxu0
        %573 = vmatprep.mubr.bf16.mxu0 0
        %574 = vmatmul.mubr.bf16.gmra.mxu0 %v511
        %v575 = vpop.f32.mrf.mxu0
        %v576 = vadd.f32 0.0, %v575
        %v577 = vpop.f32.mrf.mxu0
        %v578 = vpop.f32.mrf.mxu0
        %v579 = vadd.f32 0.0, %v578
        %v580 = vpop.f32.mrf.mxu0
        %581 = vdwg.mxu0
        %vm582 = vcmask 523264
        %v583 = vsel %vm582, %v552, -inf
        %v584 = vsel %vm582, %v555, -inf
        %v585 = vsel %vm582, %v560, -inf
        %v586 = vsel %vm582, %v563, -inf
        %v587 = vsel %vm582, %v568, -inf
        %v588 = vmax.f32 %v583, %v587
        %v589 = vsel %vm582, %v571, -inf
        %v590 = vmax.f32 %v584, %v589
        %v591 = vsel %vm582, %v576, -inf
        %v592 = vmax.f32 %v585, %v591
        %v593 = vsel %vm582, %v579, -inf
        %v594 = vmax.f32 %v586, %v593
        %v595 = vmax.f32 %v588, %v590
        %v596 = vmax.f32 %v592, %v594
        %v597 = vmax.f32 %v595, %v596
        %v598 = vrot.slane %v597, 4
        %v599 = vmax.f32 %v597, %v598
        %v600 = vrot.slane %v599, 2
        %v601 = vmax.f32 %v599, %v600
        %v602 = vrot.slane %v601, 1
        %v603 = vmax.f32 %v601, %v602
        %v604 = vsub.f32 %v552, %v603
        %v605 = vsub.f32 %v555, %v603
        %v606 = vsub.f32 %v560, %v603
        %v607 = vsub.f32 %v563, %v603
        %v608 = vsub.f32 %v568, %v603
        %v609 = vsub.f32 %v571, %v603
        %v610 = vsub.f32 %v576, %v603
        %v611 = vsub.f32 %v579, %v603
        %v612 = vpack.c.bf16 %v605, %v604
        %v613 = vpack.c.bf16 %v607, %v606
        %v614 = vpack.c.bf16 %v609, %v608
        %v615 = vpack.c.bf16 %v611, %v610
        %v617 = vmul.bf16 %v612, 1069105081
        %v618 = vpow.bf16.pop %v617
        %v620 = vmul.bf16 %v613, 1069105081
        %v621 = vpow.bf16.pop %v620
        %v623 = vmul.bf16 %v614, 1069105081
        %v624 = vpow.bf16.pop %v623
        %v626 = vmul.bf16 %v615, 1069105081
        %v627 = vpow.bf16.pop %v626
        %v628 = vunpack.c.l.bf16 %v618
        %v629 = vunpack.c.h.bf16 %v618
        %v630 = vunpack.c.l.bf16 %v621
        %v631 = vunpack.c.h.bf16 %v621
        %v632 = vunpack.c.l.bf16 %v624
        %v633 = vunpack.c.h.bf16 %v624
        %v634 = vunpack.c.l.bf16 %v627
        %v635 = vunpack.c.h.bf16 %v627
        %v636 = vsel %vm582, %v628, 0.0
        %v637 = vsel %vm582, %v629, 0.0
        %v638 = vadd.f32 %v636, %v637
        %v639 = vsel %vm582, %v630, 0.0
        %v640 = vadd.f32 %v638, %v639
        %v641 = vsel %vm582, %v631, 0.0
        %v642 = vadd.f32 %v640, %v641
        %v643 = vsel %vm582, %v632, 0.0
        %v644 = vadd.f32 %v642, %v643
        %v645 = vsel %vm582, %v633, 0.0
        %v646 = vadd.f32 %v644, %v645
        %v647 = vsel %vm582, %v634, 0.0
        %v648 = vadd.f32 %v646, %v647
        %v649 = vsel %vm582, %v635, 0.0
        %v650 = vadd.f32 %v648, %v649
        %v651 = vrot.slane %v650, 4
        %v652 = vadd.f32 %v650, %v651
        %v653 = vrot.slane %v652, 2
        %v654 = vadd.f32 %v652, %v653
        %v655 = vrot.slane %v654, 1
        %v656 = vadd.f32 %v654, %v655
        %v658 = vsel %vm582, %v499, 0
        %660 = vmatprep.subr.bf16.mxu0 0
        %661 = vmatpush1.bf16.msra.mxu0 0
        %662 = vmatprep.subr.bf16.mxu0 0
        %663 = vmatpush1.bf16.msra.mxu0 0
        %664 = vmatprep.subr.bf16.mxu0 0
        %665 = vmatpush1.bf16.msra.mxu0 0
        %666 = vmatprep.subr.bf16.mxu0 0
        %667 = vmatpush1.bf16.msra.mxu0 0
        %668 = vmatprep.subr.bf16.mxu0 0
        %669 = vmatpush1.bf16.msra.mxu0 %v627
        %670 = vmatprep.subr.bf16.mxu0 0
        %671 = vmatpush1.bf16.msra.mxu0 %v624
        %672 = vmatprep.subr.bf16.mxu0 0
        %673 = vmatpush1.bf16.msra.mxu0 %v621
        %674 = vmatprep.subr.bf16.mxu0 0
        %675 = vmatpush1.bf16.msra.mxu0 %v618
        %676 = vmatprep.subr.bf16.mxu0 0
        %677 = vmatpush2.bf16.msra.mxu0 0
        %678 = vmatprep.subr.bf16.mxu0 0
        %679 = vmatpush2.bf16.msra.mxu0 0
        %680 = vmatprep.subr.bf16.mxu0 0
        %681 = vmatpush2.bf16.msra.mxu0 0
        %682 = vmatprep.subr.bf16.mxu0 0
        %683 = vmatpush2.bf16.msra.mxu0 0
        %684 = vmatprep.subr.bf16.mxu0 0
        %685 = vmatpush2.bf16.msra.mxu0 0
        %686 = vmatprep.subr.bf16.mxu0 0
        %687 = vmatpush2.bf16.msra.mxu0 0
        %688 = vmatprep.subr.bf16.mxu0 0
        %689 = vmatpush2.bf16.msra.mxu0 0
        %690 = vmatprep.subr.bf16.mxu0 0
        %691 = vmatpush2.bf16.msra.mxu0 0
        %692 = vmatprep.mubr.bf16.mxu0 0
        %693 = vmatmul.mubr.bf16.gmra.mxu0 %v658
        %v694 = vpop.f32.mrf.mxu0
        %v695 = vadd.f32 0.0, %v694
        %v696 = vpop.f32.mrf.mxu0
        %v697 = vpop.f32.mrf.mxu0
        %v698 = vpop.f32.mrf.mxu0
        %699 = vdwg.mxu0
        %v700 = vrcp.pop %v656
        %v701 = vmul.f32 %v695, %v700
        %702 = vst.msk [vmem:[#allocation2] sm:$0xff] %vm582, %v701
        %v703 = vpack.c.bf16 %v419, %v419
        %704 = vxpose.xlu0.b32.start [1/16] %v435, 128
        %705 = vxpose.xlu0.b32.cont [2/16] 0.0, 128
        %706 = vxpose.xlu0.b32.cont [3/16] 0.0, 128
        %707 = vxpose.xlu0.b32.cont [4/16] 0.0, 128
        %708 = vxpose.xlu0.b32.cont [5/16] 0.0, 128
        %709 = vxpose.xlu0.b32.cont [6/16] 0.0, 128
        %710 = vxpose.xlu0.b32.cont [7/16] 0.0, 128
        %711 = vxpose.xlu0.b32.cont [8/16] 0.0, 128
        %712 = vxpose.xlu0.b32.cont [9/16] 0.0, 128
        %713 = vxpose.xlu0.b32.cont [10/16] 0.0, 128
        %714 = vxpose.xlu0.b32.cont [11/16] 0.0, 128
        %715 = vxpose.xlu0.b32.cont [12/16] 0.0, 128
        %716 = vxpose.xlu0.b32.cont [13/16] 0.0, 128
        %717 = vxpose.xlu0.b32.cont [14/16] 0.0, 128
        %718 = vxpose.xlu0.b32.cont [15/16] 0.0, 128
        %719 = vxpose.xlu0.b32.end [16/16] 0.0, 128
        %v720 = vpop.trf.xlu0
        %v721 = vpop.trf.xlu0
        %v722 = vpop.trf.xlu0
        %v723 = vpop.trf.xlu0
        %v724 = vpop.trf.xlu0
        %v725 = vpop.trf.xlu0
        %v726 = vpop.trf.xlu0
        %v727 = vpop.trf.xlu0
        %v728 = vpop.trf.xlu0
        %v729 = vpop.trf.xlu0
        %v730 = vpop.trf.xlu0
        %v731 = vpop.trf.xlu0
        %v732 = vpop.trf.xlu0
        %v733 = vpop.trf.xlu0
        %v734 = vpop.trf.xlu0
        %v735 = vpop.trf.xlu0
        %v736 = vpack.c.bf16 %v721, %v720
        %v737 = vpack.c.bf16 %v723, %v722
        %v738 = vpack.c.bf16 %v725, %v724
        %v739 = vpack.c.bf16 %v727, %v726
        %v740 = vpack.c.bf16 %v451, %v451
        %v742 = vsel %vm500, %v736, 0
        %v745 = vsel %vm500, %v737, 0
        %v748 = vsel %vm500, %v738, 0
        %v751 = vsel %vm500, %v739, 0
        %v754 = vsel %vm513, %v703, 0
        %756 = vmatprep.subr.bf16.mxu0 0
        %757 = vmatpush1.bf16.msra.mxu0 0
        %758 = vmatprep.subr.bf16.mxu0 0
        %759 = vmatpush1.bf16.msra.mxu0 0
        %760 = vmatprep.subr.bf16.mxu0 0
        %761 = vmatpush1.bf16.msra.mxu0 0
        %762 = vmatprep.subr.bf16.mxu0 0
        %763 = vmatpush1.bf16.msra.mxu0 0
        %764 = vmatprep.subr.bf16.mxu0 0
        %765 = vmatpush1.bf16.msra.mxu0 0
        %766 = vmatprep.subr.bf16.mxu0 0
        %767 = vmatpush1.bf16.msra.mxu0 0
        %768 = vmatprep.subr.bf16.mxu0 0
        %769 = vmatpush1.bf16.msra.mxu0 0
        %770 = vmatprep.subr.bf16.mxu0 0
        %771 = vmatpush1.bf16.msra.mxu0 %v754
        %772 = vmatprep.subr.bf16.mxu0 0
        %773 = vmatpush2.bf16.msra.mxu0 0
        %774 = vmatprep.subr.bf16.mxu0 0
        %775 = vmatpush2.bf16.msra.mxu0 0
        %776 = vmatprep.subr.bf16.mxu0 0
        %777 = vmatpush2.bf16.msra.mxu0 0
        %778 = vmatprep.subr.bf16.mxu0 0
        %779 = vmatpush2.bf16.msra.mxu0 0
        %780 = vmatprep.subr.bf16.mxu0 0
        %781 = vmatpush2.bf16.msra.mxu0 0
        %782 = vmatprep.subr.bf16.mxu0 0
        %783 = vmatpush2.bf16.msra.mxu0 0
        %784 = vmatprep.subr.bf16.mxu0 0
        %785 = vmatpush2.bf16.msra.mxu0 0
        %786 = vmatprep.subr.bf16.mxu0 0
        %787 = vmatpush2.bf16.msra.mxu0 0
        %788 = vmatprep.mubr.bf16.mxu0 0
        %789 = vmatmul.mubr.bf16.gmra.mxu0 %v742
        %v790 = vpop.f32.mrf.mxu0
        %v791 = vadd.f32 0.0, %v790
        %v792 = vpop.f32.mrf.mxu0
        %v793 = vpop.f32.mrf.mxu0
        %v794 = vadd.f32 0.0, %v793
        %v795 = vpop.f32.mrf.mxu0
        %796 = vmatprep.mubr.bf16.mxu0 0
        %797 = vmatmul.mubr.bf16.gmra.mxu0 %v745
        %v798 = vpop.f32.mrf.mxu0
        %v799 = vadd.f32 0.0, %v798
        %v800 = vpop.f32.mrf.mxu0
        %v801 = vpop.f32.mrf.mxu0
        %v802 = vadd.f32 0.0, %v801
        %v803 = vpop.f32.mrf.mxu0
        %804 = vmatprep.mubr.bf16.mxu0 0
        %805 = vmatmul.mubr.bf16.gmra.mxu0 %v748
        %v806 = vpop.f32.mrf.mxu0
        %v807 = vadd.f32 0.0, %v806
        %v808 = vpop.f32.mrf.mxu0
        %v809 = vpop.f32.mrf.mxu0
        %v810 = vadd.f32 0.0, %v809
        %v811 = vpop.f32.mrf.mxu0
        %812 = vmatprep.mubr.bf16.mxu0 0
        %813 = vmatmul.mubr.bf16.gmra.mxu0 %v751
        %v814 = vpop.f32.mrf.mxu0
        %v815 = vadd.f32 0.0, %v814
        %v816 = vpop.f32.mrf.mxu0
        %v817 = vpop.f32.mrf.mxu0
        %v818 = vadd.f32 0.0, %v817
        %v819 = vpop.f32.mrf.mxu0
        %820 = vdwg.mxu0
        %v821 = vsel %vm582, %v791, -inf
        %v822 = vsel %vm582, %v794, -inf
        %v823 = vsel %vm582, %v799, -inf
        %v824 = vsel %vm582, %v802, -inf
        %v825 = vsel %vm582, %v807, -inf
        %v826 = vmax.f32 %v821, %v825
        %v827 = vsel %vm582, %v810, -inf
        %v828 = vmax.f32 %v822, %v827
        %v829 = vsel %vm582, %v815, -inf
        %v830 = vmax.f32 %v823, %v829
        %v831 = vsel %vm582, %v818, -inf
        %v832 = vmax.f32 %v824, %v831
        %v833 = vmax.f32 %v826, %v828
        %v834 = vmax.f32 %v830, %v832
        %v835 = vmax.f32 %v833, %v834
        %v836 = vrot.slane %v835, 4
        %v837 = vmax.f32 %v835, %v836
        %v838 = vrot.slane %v837, 2
        %v839 = vmax.f32 %v837, %v838
        %v840 = vrot.slane %v839, 1
        %v841 = vmax.f32 %v839, %v840
        %v842 = vsub.f32 %v791, %v841
        %v843 = vsub.f32 %v794, %v841
        %v844 = vsub.f32 %v799, %v841
        %v845 = vsub.f32 %v802, %v841
        %v846 = vsub.f32 %v807, %v841
        %v847 = vsub.f32 %v810, %v841
        %v848 = vsub.f32 %v815, %v841
        %v849 = vsub.f32 %v818, %v841
        %v850 = vpack.c.bf16 %v843, %v842
        %v851 = vpack.c.bf16 %v845, %v844
        %v852 = vpack.c.bf16 %v847, %v846
        %v853 = vpack.c.bf16 %v849, %v848
        %v855 = vmul.bf16 %v850, 1069105081
        %v856 = vpow.bf16.pop %v855
        %v858 = vmul.bf16 %v851, 1069105081
        %v859 = vpow.bf16.pop %v858
        %v861 = vmul.bf16 %v852, 1069105081
        %v862 = vpow.bf16.pop %v861
        %v864 = vmul.bf16 %v853, 1069105081
        %v865 = vpow.bf16.pop %v864
        %v866 = vunpack.c.l.bf16 %v856
        %v867 = vunpack.c.h.bf16 %v856
        %v868 = vunpack.c.l.bf16 %v859
        %v869 = vunpack.c.h.bf16 %v859
        %v870 = vunpack.c.l.bf16 %v862
        %v871 = vunpack.c.h.bf16 %v862
        %v872 = vunpack.c.l.bf16 %v865
        %v873 = vunpack.c.h.bf16 %v865
        %v874 = vsel %vm582, %v866, 0.0
        %v875 = vsel %vm582, %v867, 0.0
        %v876 = vadd.f32 %v874, %v875
        %v877 = vsel %vm582, %v868, 0.0
        %v878 = vadd.f32 %v876, %v877
        %v879 = vsel %vm582, %v869, 0.0
        %v880 = vadd.f32 %v878, %v879
        %v881 = vsel %vm582, %v870, 0.0
        %v882 = vadd.f32 %v880, %v881
        %v883 = vsel %vm582, %v871, 0.0
        %v884 = vadd.f32 %v882, %v883
        %v885 = vsel %vm582, %v872, 0.0
        %v886 = vadd.f32 %v884, %v885
        %v887 = vsel %vm582, %v873, 0.0
        %v888 = vadd.f32 %v886, %v887
        %v889 = vrot.slane %v888, 4
        %v890 = vadd.f32 %v888, %v889
        %v891 = vrot.slane %v890, 2
        %v892 = vadd.f32 %v890, %v891
        %v893 = vrot.slane %v892, 1
        %v894 = vadd.f32 %v892, %v893
        %v896 = vsel %vm582, %v740, 0
        %898 = vmatprep.subr.bf16.mxu0 0
        %899 = vmatpush1.bf16.msra.mxu0 0
        %900 = vmatprep.subr.bf16.mxu0 0
        %901 = vmatpush1.bf16.msra.mxu0 0
        %902 = vmatprep.subr.bf16.mxu0 0
        %903 = vmatpush1.bf16.msra.mxu0 0
        %904 = vmatprep.subr.bf16.mxu0 0
        %905 = vmatpush1.bf16.msra.mxu0 0
        %906 = vmatprep.subr.bf16.mxu0 0
        %907 = vmatpush1.bf16.msra.mxu0 %v865
        %908 = vmatprep.subr.bf16.mxu0 0
        %909 = vmatpush1.bf16.msra.mxu0 %v862
        %910 = vmatprep.subr.bf16.mxu0 0
        %911 = vmatpush1.bf16.msra.mxu0 %v859
        %912 = vmatprep.subr.bf16.mxu0 0
        %913 = vmatpush1.bf16.msra.mxu0 %v856
        %914 = vmatprep.subr.bf16.mxu0 0
        %915 = vmatpush2.bf16.msra.mxu0 0
        %916 = vmatprep.subr.bf16.mxu0 0
        %917 = vmatpush2.bf16.msra.mxu0 0
        %918 = vmatprep.subr.bf16.mxu0 0
        %919 = vmatpush2.bf16.msra.mxu0 0
        %920 = vmatprep.subr.bf16.mxu0 0
        %921 = vmatpush2.bf16.msra.mxu0 0
        %922 = vmatprep.subr.bf16.mxu0 0
        %923 = vmatpush2.bf16.msra.mxu0 0
        %924 = vmatprep.subr.bf16.mxu0 0
        %925 = vmatpush2.bf16.msra.mxu0 0
        %926 = vmatprep.subr.bf16.mxu0 0
        %927 = vmatpush2.bf16.msra.mxu0 0
        %928 = vmatprep.subr.bf16.mxu0 0
        %929 = vmatpush2.bf16.msra.mxu0 0
        %930 = vmatprep.mubr.bf16.mxu0 0
        %931 = vmatmul.mubr.bf16.gmra.mxu0 %v896
        %v932 = vpop.f32.mrf.mxu0
        %v933 = vadd.f32 0.0, %v932
        %v934 = vpop.f32.mrf.mxu0
        %v935 = vpop.f32.mrf.mxu0
        %v936 = vpop.f32.mrf.mxu0
        %937 = vdwg.mxu0
        %v938 = vrcp.pop %v894
        %v939 = vmul.f32 %v933, %v938
        %940 = vst.msk [vmem:[#allocation2 + $0x8] sm:$0xff] %vm582, %v939
        %v941 = vpack.c.bf16 %v424, %v424
        %942 = vxpose.xlu0.b32.start [1/16] %v440, 128
        %943 = vxpose.xlu0.b32.cont [2/16] 0.0, 128
        %944 = vxpose.xlu0.b32.cont [3/16] 0.0, 128
        %945 = vxpose.xlu0.b32.cont [4/16] 0.0, 128
        %946 = vxpose.xlu0.b32.cont [5/16] 0.0, 128
        %947 = vxpose.xlu0.b32.cont [6/16] 0.0, 128
        %948 = vxpose.xlu0.b32.cont [7/16] 0.0, 128
        %949 = vxpose.xlu0.b32.cont [8/16] 0.0, 128
        %950 = vxpose.xlu0.b32.cont [9/16] 0.0, 128
        %951 = vxpose.xlu0.b32.cont [10/16] 0.0, 128
        %952 = vxpose.xlu0.b32.cont [11/16] 0.0, 128
        %953 = vxpose.xlu0.b32.cont [12/16] 0.0, 128
        %954 = vxpose.xlu0.b32.cont [13/16] 0.0, 128
        %955 = vxpose.xlu0.b32.cont [14/16] 0.0, 128
        %956 = vxpose.xlu0.b32.cont [15/16] 0.0, 128
        %957 = vxpose.xlu0.b32.end [16/16] 0.0, 128
        %v958 = vpop.trf.xlu0
        %v959 = vpop.trf.xlu0
        %v960 = vpop.trf.xlu0
        %v961 = vpop.trf.xlu0
        %v962 = vpop.trf.xlu0
        %v963 = vpop.trf.xlu0
        %v964 = vpop.trf.xlu0
        %v965 = vpop.trf.xlu0
        %v966 = vpop.trf.xlu0
        %v967 = vpop.trf.xlu0
        %v968 = vpop.trf.xlu0
        %v969 = vpop.trf.xlu0
        %v970 = vpop.trf.xlu0
        %v971 = vpop.trf.xlu0
        %v972 = vpop.trf.xlu0
        %v973 = vpop.trf.xlu0
        %v974 = vpack.c.bf16 %v959, %v958
        %v975 = vpack.c.bf16 %v961, %v960
        %v976 = vpack.c.bf16 %v963, %v962
        %v977 = vpack.c.bf16 %v965, %v964
        %v978 = vpack.c.bf16 %v456, %v456
        %v980 = vsel %vm500, %v974, 0
        %v983 = vsel %vm500, %v975, 0
        %v986 = vsel %vm500, %v976, 0
        %v989 = vsel %vm500, %v977, 0
        %v992 = vsel %vm513, %v941, 0
        %994 = vmatprep.subr.bf16.mxu0 0
        %995 = vmatpush1.bf16.msra.mxu0 0
        %996 = vmatprep.subr.bf16.mxu0 0
        %997 = vmatpush1.bf16.msra.mxu0 0
        %998 = vmatprep.subr.bf16.mxu0 0
        %999 = vmatpush1.bf16.msra.mxu0 0
        %1000 = vmatprep.subr.bf16.mxu0 0
        %1001 = vmatpush1.bf16.msra.mxu0 0
        %1002 = vmatprep.subr.bf16.mxu0 0
        %1003 = vmatpush1.bf16.msra.mxu0 0
        %1004 = vmatprep.subr.bf16.mxu0 0
        %1005 = vmatpush1.bf16.msra.mxu0 0
        %1006 = vmatprep.subr.bf16.mxu0 0
        %1007 = vmatpush1.bf16.msra.mxu0 0
        %1008 = vmatprep.subr.bf16.mxu0 0
        %1009 = vmatpush1.bf16.msra.mxu0 %v992
        %1010 = vmatprep.subr.bf16.mxu0 0
        %1011 = vmatpush2.bf16.msra.mxu0 0
        %1012 = vmatprep.subr.bf16.mxu0 0
        %1013 = vmatpush2.bf16.msra.mxu0 0
        %1014 = vmatprep.subr.bf16.mxu0 0
        %1015 = vmatpush2.bf16.msra.mxu0 0
        %1016 = vmatprep.subr.bf16.mxu0 0
        %1017 = vmatpush2.bf16.msra.mxu0 0
        %1018 = vmatprep.subr.bf16.mxu0 0
        %1019 = vmatpush2.bf16.msra.mxu0 0
        %1020 = vmatprep.subr.bf16.mxu0 0
        %1021 = vmatpush2.bf16.msra.mxu0 0
        %1022 = vmatprep.subr.bf16.mxu0 0
        %1023 = vmatpush2.bf16.msra.mxu0 0
        %1024 = vmatprep.subr.bf16.mxu0 0
        %1025 = vmatpush2.bf16.msra.mxu0 0
        %1026 = vmatprep.mubr.bf16.mxu0 0
        %1027 = vmatmul.mubr.bf16.gmra.mxu0 %v980
        %v1028 = vpop.f32.mrf.mxu0
        %v1029 = vadd.f32 0.0, %v1028
        %v1030 = vpop.f32.mrf.mxu0
        %v1031 = vpop.f32.mrf.mxu0
        %v1032 = vadd.f32 0.0, %v1031
        %v1033 = vpop.f32.mrf.mxu0
        %1034 = vmatprep.mubr.bf16.mxu0 0
        %1035 = vmatmul.mubr.bf16.gmra.mxu0 %v983
        %v1036 = vpop.f32.mrf.mxu0
        %v1037 = vadd.f32 0.0, %v1036
        %v1038 = vpop.f32.mrf.mxu0
        %v1039 = vpop.f32.mrf.mxu0
        %v1040 = vadd.f32 0.0, %v1039
        %v1041 = vpop.f32.mrf.mxu0
        %1042 = vmatprep.mubr.bf16.mxu0 0
        %1043 = vmatmul.mubr.bf16.gmra.mxu0 %v986
        %v1044 = vpop.f32.mrf.mxu0
        %v1045 = vadd.f32 0.0, %v1044
        %v1046 = vpop.f32.mrf.mxu0
        %v1047 = vpop.f32.mrf.mxu0
        %v1048 = vadd.f32 0.0, %v1047
        %v1049 = vpop.f32.mrf.mxu0
        %1050 = vmatprep.mubr.bf16.mxu0 0
        %1051 = vmatmul.mubr.bf16.gmra.mxu0 %v989
        %v1052 = vpop.f32.mrf.mxu0
        %v1053 = vadd.f32 0.0, %v1052
        %v1054 = vpop.f32.mrf.mxu0
        %v1055 = vpop.f32.mrf.mxu0
        %v1056 = vadd.f32 0.0, %v1055
        %v1057 = vpop.f32.mrf.mxu0
        %1058 = vdwg.mxu0
        %v1059 = vsel %vm582, %v1029, -inf
        %v1060 = vsel %vm582, %v1032, -inf
        %v1061 = vsel %vm582, %v1037, -inf
        %v1062 = vsel %vm582, %v1040, -inf
        %v1063 = vsel %vm582, %v1045, -inf
        %v1064 = vmax.f32 %v1059, %v1063
        %v1065 = vsel %vm582, %v1048, -inf
        %v1066 = vmax.f32 %v1060, %v1065
        %v1067 = vsel %vm582, %v1053, -inf
        %v1068 = vmax.f32 %v1061, %v1067
        %v1069 = vsel %vm582, %v1056, -inf
        %v1070 = vmax.f32 %v1062, %v1069
        %v1071 = vmax.f32 %v1064, %v1066
        %v1072 = vmax.f32 %v1068, %v1070
        %v1073 = vmax.f32 %v1071, %v1072
        %v1074 = vrot.slane %v1073, 4
        %v1075 = vmax.f32 %v1073, %v1074
        %v1076 = vrot.slane %v1075, 2
        %v1077 = vmax.f32 %v1075, %v1076
        %v1078 = vrot.slane %v1077, 1
        %v1079 = vmax.f32 %v1077, %v1078
        %v1080 = vsub.f32 %v1029, %v1079
        %v1081 = vsub.f32 %v1032, %v1079
        %v1082 = vsub.f32 %v1037, %v1079
        %v1083 = vsub.f32 %v1040, %v1079
        %v1084 = vsub.f32 %v1045, %v1079
        %v1085 = vsub.f32 %v1048, %v1079
        %v1086 = vsub.f32 %v1053, %v1079
        %v1087 = vsub.f32 %v1056, %v1079
        %v1088 = vpack.c.bf16 %v1081, %v1080
        %v1089 = vpack.c.bf16 %v1083, %v1082
        %v1090 = vpack.c.bf16 %v1085, %v1084
        %v1091 = vpack.c.bf16 %v1087, %v1086
        %v1093 = vmul.bf16 %v1088, 1069105081
        %v1094 = vpow.bf16.pop %v1093
        %v1096 = vmul.bf16 %v1089, 1069105081
        %v1097 = vpow.bf16.pop %v1096
        %v1099 = vmul.bf16 %v1090, 1069105081
        %v1100 = vpow.bf16.pop %v1099
        %v1102 = vmul.bf16 %v1091, 1069105081
        %v1103 = vpow.bf16.pop %v1102
        %v1104 = vunpack.c.l.bf16 %v1094
        %v1105 = vunpack.c.h.bf16 %v1094
        %v1106 = vunpack.c.l.bf16 %v1097
        %v1107 = vunpack.c.h.bf16 %v1097
        %v1108 = vunpack.c.l.bf16 %v1100
        %v1109 = vunpack.c.h.bf16 %v1100
        %v1110 = vunpack.c.l.bf16 %v1103
        %v1111 = vunpack.c.h.bf16 %v1103
        %v1112 = vsel %vm582, %v1104, 0.0
        %v1113 = vsel %vm582, %v1105, 0.0
        %v1114 = vadd.f32 %v1112, %v1113
        %v1115 = vsel %vm582, %v1106, 0.0
        %v1116 = vadd.f32 %v1114, %v1115
        %v1117 = vsel %vm582, %v1107, 0.0
        %v1118 = vadd.f32 %v1116, %v1117
        %v1119 = vsel %vm582, %v1108, 0.0
        %v1120 = vadd.f32 %v1118, %v1119
        %v1121 = vsel %vm582, %v1109, 0.0
        %v1122 = vadd.f32 %v1120, %v1121
        %v1123 = vsel %vm582, %v1110, 0.0
        %v1124 = vadd.f32 %v1122, %v1123
        %v1125 = vsel %vm582, %v1111, 0.0
        %v1126 = vadd.f32 %v1124, %v1125
        %v1127 = vrot.slane %v1126, 4
        %v1128 = vadd.f32 %v1126, %v1127
        %v1129 = vrot.slane %v1128, 2
        %v1130 = vadd.f32 %v1128, %v1129
        %v1131 = vrot.slane %v1130, 1
        %v1132 = vadd.f32 %v1130, %v1131
        %v1134 = vsel %vm582, %v978, 0
        %1136 = vmatprep.subr.bf16.mxu0 0
        %1137 = vmatpush1.bf16.msra.mxu0 0
        %1138 = vmatprep.subr.bf16.mxu0 0
        %1139 = vmatpush1.bf16.msra.mxu0 0
        %1140 = vmatprep.subr.bf16.mxu0 0
        %1141 = vmatpush1.bf16.msra.mxu0 0
        %1142 = vmatprep.subr.bf16.mxu0 0
        %1143 = vmatpush1.bf16.msra.mxu0 0
        %1144 = vmatprep.subr.bf16.mxu0 0
        %1145 = vmatpush1.bf16.msra.mxu0 %v1103
        %1146 = vmatprep.subr.bf16.mxu0 0
        %1147 = vmatpush1.bf16.msra.mxu0 %v1100
        %1148 = vmatprep.subr.bf16.mxu0 0
        %1149 = vmatpush1.bf16.msra.mxu0 %v1097
        %1150 = vmatprep.subr.bf16.mxu0 0
        %1151 = vmatpush1.bf16.msra.mxu0 %v1094
        %1152 = vmatprep.subr.bf16.mxu0 0
        %1153 = vmatpush2.bf16.msra.mxu0 0
        %1154 = vmatprep.subr.bf16.mxu0 0
        %1155 = vmatpush2.bf16.msra.mxu0 0
        %1156 = vmatprep.subr.bf16.mxu0 0
        %1157 = vmatpush2.bf16.msra.mxu0 0
        %1158 = vmatprep.subr.bf16.mxu0 0
        %1159 = vmatpush2.bf16.msra.mxu0 0
        %1160 = vmatprep.subr.bf16.mxu0 0
        %1161 = vmatpush2.bf16.msra.mxu0 0
        %1162 = vmatprep.subr.bf16.mxu0 0
        %1163 = vmatpush2.bf16.msra.mxu0 0
        %1164 = vmatprep.subr.bf16.mxu0 0
        %1165 = vmatpush2.bf16.msra.mxu0 0
        %1166 = vmatprep.subr.bf16.mxu0 0
        %1167 = vmatpush2.bf16.msra.mxu0 0
        %1168 = vmatprep.mubr.bf16.mxu0 0
        %1169 = vmatmul.mubr.bf16.gmra.mxu0 %v1134
        %v1170 = vpop.f32.mrf.mxu0
        %v1171 = vadd.f32 0.0, %v1170
        %v1172 = vpop.f32.mrf.mxu0
        %v1173 = vpop.f32.mrf.mxu0
        %v1174 = vpop.f32.mrf.mxu0
        %1175 = vdwg.mxu0
        %v1176 = vrcp.pop %v1132
        %v1177 = vmul.f32 %v1171, %v1176
        %1178 = vst.msk [vmem:[#allocation2 + $0x10] sm:$0xff] %vm582, %v1177
        %v1179 = vpack.c.bf16 %v427, %v427
        %1180 = vxpose.xlu0.b32.start [1/16] %v443, 128
        %1181 = vxpose.xlu0.b32.cont [2/16] 0.0, 128
        %1182 = vxpose.xlu0.b32.cont [3/16] 0.0, 128
        %1183 = vxpose.xlu0.b32.cont [4/16] 0.0, 128
        %1184 = vxpose.xlu0.b32.cont [5/16] 0.0, 128
        %1185 = vxpose.xlu0.b32.cont [6/16] 0.0, 128
        %1186 = vxpose.xlu0.b32.cont [7/16] 0.0, 128
        %1187 = vxpose.xlu0.b32.cont [8/16] 0.0, 128
        %1188 = vxpose.xlu0.b32.cont [9/16] 0.0, 128
        %1189 = vxpose.xlu0.b32.cont [10/16] 0.0, 128
        %1190 = vxpose.xlu0.b32.cont [11/16] 0.0, 128
        %1191 = vxpose.xlu0.b32.cont [12/16] 0.0, 128
        %1192 = vxpose.xlu0.b32.cont [13/16] 0.0, 128
        %1193 = vxpose.xlu0.b32.cont [14/16] 0.0, 128
        %1194 = vxpose.xlu0.b32.cont [15/16] 0.0, 128
        %1195 = vxpose.xlu0.b32.end [16/16] 0.0, 128
        %v1196 = vpop.trf.xlu0
        %v1197 = vpop.trf.xlu0
        %v1198 = vpop.trf.xlu0
        %v1199 = vpop.trf.xlu0
        %v1200 = vpop.trf.xlu0
        %v1201 = vpop.trf.xlu0
        %v1202 = vpop.trf.xlu0
        %v1203 = vpop.trf.xlu0
        %v1204 = vpop.trf.xlu0
        %v1205 = vpop.trf.xlu0
        %v1206 = vpop.trf.xlu0
        %v1207 = vpop.trf.xlu0
        %v1208 = vpop.trf.xlu0
        %v1209 = vpop.trf.xlu0
        %v1210 = vpop.trf.xlu0
        %v1211 = vpop.trf.xlu0
        %v1212 = vpack.c.bf16 %v1197, %v1196
        %v1213 = vpack.c.bf16 %v1199, %v1198
        %v1214 = vpack.c.bf16 %v1201, %v1200
        %v1215 = vpack.c.bf16 %v1203, %v1202
        %v1216 = vpack.c.bf16 %v459, %v459
        %v1218 = vsel %vm500, %v1212, 0
        %v1221 = vsel %vm500, %v1213, 0
        %v1224 = vsel %vm500, %v1214, 0
        %v1227 = vsel %vm500, %v1215, 0
        %v1230 = vsel %vm513, %v1179, 0
        %1232 = vmatprep.subr.bf16.mxu0 0
        %1233 = vmatpush1.bf16.msra.mxu0 0
        %1234 = vmatprep.subr.bf16.mxu0 0
        %1235 = vmatpush1.bf16.msra.mxu0 0
        %1236 = vmatprep.subr.bf16.mxu0 0
        %1237 = vmatpush1.bf16.msra.mxu0 0
        %1238 = vmatprep.subr.bf16.mxu0 0
        %1239 = vmatpush1.bf16.msra.mxu0 0
        %1240 = vmatprep.subr.bf16.mxu0 0
        %1241 = vmatpush1.bf16.msra.mxu0 0
        %1242 = vmatprep.subr.bf16.mxu0 0
        %1243 = vmatpush1.bf16.msra.mxu0 0
        %1244 = vmatprep.subr.bf16.mxu0 0
        %1245 = vmatpush1.bf16.msra.mxu0 0
        %1246 = vmatprep.subr.bf16.mxu0 0
        %1247 = vmatpush1.bf16.msra.mxu0 %v1230
        %1248 = vmatprep.subr.bf16.mxu0 0
        %1249 = vmatpush2.bf16.msra.mxu0 0
        %1250 = vmatprep.subr.bf16.mxu0 0
        %1251 = vmatpush2.bf16.msra.mxu0 0
        %1252 = vmatprep.subr.bf16.mxu0 0
        %1253 = vmatpush2.bf16.msra.mxu0 0
        %1254 = vmatprep.subr.bf16.mxu0 0
        %1255 = vmatpush2.bf16.msra.mxu0 0
        %1256 = vmatprep.subr.bf16.mxu0 0
        %1257 = vmatpush2.bf16.msra.mxu0 0
        %1258 = vmatprep.subr.bf16.mxu0 0
        %1259 = vmatpush2.bf16.msra.mxu0 0
        %1260 = vmatprep.subr.bf16.mxu0 0
        %1261 = vmatpush2.bf16.msra.mxu0 0
        %1262 = vmatprep.subr.bf16.mxu0 0
        %1263 = vmatpush2.bf16.msra.mxu0 0
        %1264 = vmatprep.mubr.bf16.mxu0 0
        %1265 = vmatmul.mubr.bf16.gmra.mxu0 %v1218
        %v1266 = vpop.f32.mrf.mxu0
        %v1267 = vadd.f32 0.0, %v1266
        %v1268 = vpop.f32.mrf.mxu0
        %v1269 = vpop.f32.mrf.mxu0
        %v1270 = vadd.f32 0.0, %v1269
        %v1271 = vpop.f32.mrf.mxu0
        %1272 = vmatprep.mubr.bf16.mxu0 0
        %1273 = vmatmul.mubr.bf16.gmra.mxu0 %v1221
        %v1274 = vpop.f32.mrf.mxu0
        %v1275 = vadd.f32 0.0, %v1274
        %v1276 = vpop.f32.mrf.mxu0
        %v1277 = vpop.f32.mrf.mxu0
        %v1278 = vadd.f32 0.0, %v1277
        %v1279 = vpop.f32.mrf.mxu0
        %1280 = vmatprep.mubr.bf16.mxu0 0
        %1281 = vmatmul.mubr.bf16.gmra.mxu0 %v1224
        %v1282 = vpop.f32.mrf.mxu0
        %v1283 = vadd.f32 0.0, %v1282
        %v1284 = vpop.f32.mrf.mxu0
        %v1285 = vpop.f32.mrf.mxu0
        %v1286 = vadd.f32 0.0, %v1285
        %v1287 = vpop.f32.mrf.mxu0
        %1288 = vmatprep.mubr.bf16.mxu0 0
        %1289 = vmatmul.mubr.bf16.gmra.mxu0 %v1227
        %v1290 = vpop.f32.mrf.mxu0
        %v1291 = vadd.f32 0.0, %v1290
        %v1292 = vpop.f32.mrf.mxu0
        %v1293 = vpop.f32.mrf.mxu0
        %v1294 = vadd.f32 0.0, %v1293
        %v1295 = vpop.f32.mrf.mxu0
        %1296 = vdwg.mxu0
        %v1297 = vsel %vm582, %v1267, -inf
        %v1298 = vsel %vm582, %v1270, -inf
        %v1299 = vsel %vm582, %v1275, -inf
        %v1300 = vsel %vm582, %v1278, -inf
        %v1301 = vsel %vm582, %v1283, -inf
        %v1302 = vmax.f32 %v1297, %v1301
        %v1303 = vsel %vm582, %v1286, -inf
        %v1304 = vmax.f32 %v1298, %v1303
        %v1305 = vsel %vm582, %v1291, -inf
        %v1306 = vmax.f32 %v1299, %v1305
        %v1307 = vsel %vm582, %v1294, -inf
        %v1308 = vmax.f32 %v1300, %v1307
        %v1309 = vmax.f32 %v1302, %v1304
        %v1310 = vmax.f32 %v1306, %v1308
        %v1311 = vmax.f32 %v1309, %v1310
        %v1312 = vrot.slane %v1311, 4
        %v1313 = vmax.f32 %v1311, %v1312
        %v1314 = vrot.slane %v1313, 2
        %v1315 = vmax.f32 %v1313, %v1314
        %v1316 = vrot.slane %v1315, 1
        %v1317 = vmax.f32 %v1315, %v1316
        %v1318 = vsub.f32 %v1267, %v1317
        %v1319 = vsub.f32 %v1270, %v1317
        %v1320 = vsub.f32 %v1275, %v1317
        %v1321 = vsub.f32 %v1278, %v1317
        %v1322 = vsub.f32 %v1283, %v1317
        %v1323 = vsub.f32 %v1286, %v1317
        %v1324 = vsub.f32 %v1291, %v1317
        %v1325 = vsub.f32 %v1294, %v1317
        %v1326 = vpack.c.bf16 %v1319, %v1318
        %v1327 = vpack.c.bf16 %v1321, %v1320
        %v1328 = vpack.c.bf16 %v1323, %v1322
        %v1329 = vpack.c.bf16 %v1325, %v1324
        %v1331 = vmul.bf16 %v1326, 1069105081
        %v1332 = vpow.bf16.pop %v1331
        %v1334 = vmul.bf16 %v1327, 1069105081
        %v1335 = vpow.bf16.pop %v1334
        %v1337 = vmul.bf16 %v1328, 1069105081
        %v1338 = vpow.bf16.pop %v1337
        %v1340 = vmul.bf16 %v1329, 1069105081
        %v1341 = vpow.bf16.pop %v1340
        %v1342 = vunpack.c.l.bf16 %v1332
        %v1343 = vunpack.c.h.bf16 %v1332
        %v1344 = vunpack.c.l.bf16 %v1335
        %v1345 = vunpack.c.h.bf16 %v1335
        %v1346 = vunpack.c.l.bf16 %v1338
        %v1347 = vunpack.c.h.bf16 %v1338
        %v1348 = vunpack.c.l.bf16 %v1341
        %v1349 = vunpack.c.h.bf16 %v1341
        %v1350 = vsel %vm582, %v1342, 0.0
        %v1351 = vsel %vm582, %v1343, 0.0
        %v1352 = vadd.f32 %v1350, %v1351
        %v1353 = vsel %vm582, %v1344, 0.0
        %v1354 = vadd.f32 %v1352, %v1353
        %v1355 = vsel %vm582, %v1345, 0.0
        %v1356 = vadd.f32 %v1354, %v1355
        %v1357 = vsel %vm582, %v1346, 0.0
        %v1358 = vadd.f32 %v1356, %v1357
        %v1359 = vsel %vm582, %v1347, 0.0
        %v1360 = vadd.f32 %v1358, %v1359
        %v1361 = vsel %vm582, %v1348, 0.0
        %v1362 = vadd.f32 %v1360, %v1361
        %v1363 = vsel %vm582, %v1349, 0.0
        %v1364 = vadd.f32 %v1362, %v1363
        %v1365 = vrot.slane %v1364, 4
        %v1366 = vadd.f32 %v1364, %v1365
        %v1367 = vrot.slane %v1366, 2
        %v1368 = vadd.f32 %v1366, %v1367
        %v1369 = vrot.slane %v1368, 1
        %v1370 = vadd.f32 %v1368, %v1369
        %v1372 = vsel %vm582, %v1216, 0
        %1374 = vmatprep.subr.bf16.mxu0 0
        %1375 = vmatpush1.bf16.msra.mxu0 0
        %1376 = vmatprep.subr.bf16.mxu0 0
        %1377 = vmatpush1.bf16.msra.mxu0 0
        %1378 = vmatprep.subr.bf16.mxu0 0
        %1379 = vmatpush1.bf16.msra.mxu0 0
        %1380 = vmatprep.subr.bf16.mxu0 0
        %1381 = vmatpush1.bf16.msra.mxu0 0
        %1382 = vmatprep.subr.bf16.mxu0 0
        %1383 = vmatpush1.bf16.msra.mxu0 %v1341
        %1384 = vmatprep.subr.bf16.mxu0 0
        %1385 = vmatpush1.bf16.msra.mxu0 %v1338
        %1386 = vmatprep.subr.bf16.mxu0 0
        %1387 = vmatpush1.bf16.msra.mxu0 %v1335
        %1388 = vmatprep.subr.bf16.mxu0 0
        %1389 = vmatpush1.bf16.msra.mxu0 %v1332
        %1390 = vmatprep.subr.bf16.mxu0 0
        %1391 = vmatpush2.bf16.msra.mxu0 0
        %1392 = vmatprep.subr.bf16.mxu0 0
        %1393 = vmatpush2.bf16.msra.mxu0 0
        %1394 = vmatprep.subr.bf16.mxu0 0
        %1395 = vmatpush2.bf16.msra.mxu0 0
        %1396 = vmatprep.subr.bf16.mxu0 0
        %1397 = vmatpush2.bf16.msra.mxu0 0
        %1398 = vmatprep.subr.bf16.mxu0 0
        %1399 = vmatpush2.bf16.msra.mxu0 0
        %1400 = vmatprep.subr.bf16.mxu0 0
        %1401 = vmatpush2.bf16.msra.mxu0 0
        %1402 = vmatprep.subr.bf16.mxu0 0
        %1403 = vmatpush2.bf16.msra.mxu0 0
        %1404 = vmatprep.subr.bf16.mxu0 0
        %1405 = vmatpush2.bf16.msra.mxu0 0
        %1406 = vmatprep.mubr.bf16.mxu0 0
        %1407 = vmatmul.mubr.bf16.gmra.mxu0 %v1372
        %v1408 = vpop.f32.mrf.mxu0
        %v1409 = vadd.f32 0.0, %v1408
        %v1410 = vpop.f32.mrf.mxu0
        %v1411 = vpop.f32.mrf.mxu0
        %v1412 = vpop.f32.mrf.mxu0
        %1413 = vdwg.mxu0
        %v1414 = vrcp.pop %v1370
        %v1415 = vmul.f32 %v1409, %v1414
        %1416 = vst.msk [vmem:[#allocation2 + $0x18] sm:$0xff] %vm582, %v1415
        %v1417 = vld [vmem:[#allocation2] sm:$0xff]
        %v1418 = vld [vmem:[#allocation2 + $0x8] sm:$0xff]
        %v1419 = vld [vmem:[#allocation2 + $0x10] sm:$0xff]
        %v1420 = vld [vmem:[#allocation2 + $0x18] sm:$0xff]
        %v1421 = vpack.c.bf16 %v1418, %v1417
        %v1422 = vpack.c.bf16 %v1420, %v1419
        %1424 = vset.pattern.permute.xlu0 0
        %1425 = vperm.xlu0 %1424, %v252
        %v1426 = vpop.permute.xlu0 %1425
        %1429 = vset.pattern.permute.xlu0 0
        %1430 = vperm.xlu0 %1429, %v253
        %v1431 = vpop.permute.xlu0 %1430
        %1434 = vset.pattern.permute.xlu0 0
        %1435 = vperm.xlu0 %1434, %v254
        %v1436 = vpop.permute.xlu0 %1435
        %1439 = vset.pattern.permute.xlu0 0
        %1440 = vperm.xlu0 %1439, %v255
        %v1441 = vpop.permute.xlu0 %1440
        %v1447 = vunpack.c.l.b16 %v248
        %v1448 = vunpack.c.l.b16 %v249
        %v1449 = vunpack.c.l.b16 %v250
        %v1450 = vunpack.c.l.b16 %v251
        %v1451 = vpack.c.b16 %v1448, %v1447
        %v1452 = vpack.c.b16 %v1450, %v1449
        %v1454 = vsel %vm362, %v1451, 0
        %v1457 = vsel %vm362, %v1452, 0
        %1459 = vmatprep.subr.bf16.mxu0 0
        %1460 = vmatpush1.bf16.msra.mxu0 0
        %1461 = vmatprep.subr.bf16.mxu0 0
        %1462 = vmatpush1.bf16.msra.mxu0 0
        %1463 = vmatprep.subr.bf16.mxu0 0
        %1464 = vmatpush1.bf16.msra.mxu0 0
        %1465 = vmatprep.subr.bf16.mxu0 0
        %1466 = vmatpush1.bf16.msra.mxu0 0
        %1467 = vmatprep.subr.bf16.mxu0 0
        %1468 = vmatpush1.bf16.msra.mxu0 0
        %1469 = vmatprep.subr.bf16.mxu0 0
        %1470 = vmatpush1.bf16.msra.mxu0 0
        %1471 = vmatprep.subr.bf16.mxu0 0
        %1472 = vmatpush1.bf16.msra.mxu0 %v1422
        %1473 = vmatprep.subr.bf16.mxu0 0
        %1474 = vmatpush1.bf16.msra.mxu0 %v1421
        %1475 = vmatprep.subr.bf16.mxu0 0
        %1476 = vmatpush2.bf16.msra.mxu0 0
        %1477 = vmatprep.subr.bf16.mxu0 0
        %1478 = vmatpush2.bf16.msra.mxu0 0
        %1479 = vmatprep.subr.bf16.mxu0 0
        %1480 = vmatpush2.bf16.msra.mxu0 0
        %1481 = vmatprep.subr.bf16.mxu0 0
        %1482 = vmatpush2.bf16.msra.mxu0 0
        %1483 = vmatprep.subr.bf16.mxu0 0
        %1484 = vmatpush2.bf16.msra.mxu0 0
        %1485 = vmatprep.subr.bf16.mxu0 0
        %1486 = vmatpush2.bf16.msra.mxu0 0
        %1487 = vmatprep.subr.bf16.mxu0 0
        %1488 = vmatpush2.bf16.msra.mxu0 0
        %1489 = vmatprep.subr.bf16.mxu0 0
        %1490 = vmatpush2.bf16.msra.mxu0 0
        %1491 = vmatprep.mubr.bf16.mxu0 0
        %1492 = vmatmul.mubr.bf16.gmra.mxu0 %v1454
        %v1493 = vpop.f32.mrf.mxu0
        %v1494 = vadd.f32 %v1426, %v1493
        %v1495 = vpop.f32.mrf.mxu0
        %v1496 = vpop.f32.mrf.mxu0
        %v1497 = vadd.f32 %v1431, %v1496
        %v1498 = vpop.f32.mrf.mxu0
        %1499 = vmatprep.mubr.bf16.mxu0 0
        %1500 = vmatmul.mubr.bf16.gmra.mxu0 %v1457
        %v1501 = vpop.f32.mrf.mxu0
        %v1502 = vadd.f32 %v1436, %v1501
        %v1503 = vpop.f32.mrf.mxu0
        %v1504 = vpop.f32.mrf.mxu0
        %v1505 = vadd.f32 %v1441, %v1504
        %v1506 = vpop.f32.mrf.mxu0
        %1507 = vdwg.mxu0
        %1508 = vst.msk [vmem:[%s217] sm:$0xff] %vm582, %v1494
        %1509 = vst.msk [vmem:[%s217 + $0x8] sm:$0xff] %vm582, %v1497
        %1510 = vst.msk [vmem:[%s217 + $0x10] sm:$0xff] %vm582, %v1502
        %1511 = vst.msk [vmem:[%s217 + $0x18] sm:$0xff] %vm582, %v1505
        %s1512 = sand.u32 %s137, 1
        %s1513 = scalar_lea.sflag [#allocation4], %s1512
        %s1514 = sand.u32 %s137, 1
        %s1515 = smul.addr %s1514, 32
        %s1516 = scalar_lea.vmem [#allocation3], %s1515
        // Predicated region
        $region41: #{tpu_custom_call.1} parent=39 // pred_check
          %p1517 = pneg %p147
        $region42: #{tpu_custom_call.1} parent=39 // pred_check_branch
          %1519 = sbr.rel (%p1517) target = $region44
        $region43: #{tpu_custom_call.1} parent=39 // pred_region
          %s1521 = ssub.s32 512, 512
          %1522 = vsyncadd %s1513, %s1521
          %s1523 = smul.addr %s19, 4
          %s1524 = smul.addr %s1523, 128
          %s1525 = scalar_lea.hbm %s5, %s1524
          %s1526 = sshll.u32 %s1516, 4
          %s1527 = int_to_ptr.vmem [resolvable:$true] %s1526
          %1532 = dma.vmem_to_hbm [thread:$0]  %s1527, 512, %s1525, %s1513, 128, 128, 8
        $region44: #{tpu_custom_call.1} parent=39 // pred_fallthru
          _
      $region40: #{tpu_custom_call.1} parent=5 // pred_fallthru
        _
      %p1533 = scmp.le.s32.totalorder 2, %s14
      // Predicated region
      $region45: #{tpu_custom_call.1} parent=5 // pred_check
        %p1534 = pneg %p1533
      $region46: #{tpu_custom_call.1} parent=5 // pred_check_branch
        %1536 = sbr.rel (%p1534) target = $region48
      $region47: #{tpu_custom_call.1} parent=5 // pred_region
        %s1537 = ssub.s32 %s14, 2
        // Predicated region
        $region49: #{tpu_custom_call.1} parent=47 // pred_check
          %p1538 = pneg %p153
        $region50: #{tpu_custom_call.1} parent=47 // pred_check_branch
          %1540 = sbr.rel (%p1538) target = $region52
        $region51: #{tpu_custom_call.1} parent=47 // pred_region
          %s1541 = sand.u32 %s138, 1
          %s1542 = scalar_lea.sflag [#allocation4], %s1541
          %s1543 = sand.u32 %s138, 1
          %s1544 = smul.addr %s1543, 32
          %s1545 = scalar_lea.vmem [#allocation3], %s1544
          %1546 = dma.done %s1542, 512
        $region52: #{tpu_custom_call.1} parent=47 // pred_fallthru
          _
      $region48: #{tpu_custom_call.1} parent=5 // pred_fallthru
        _
    $region6: #{tpu_custom_call.1} parent=1 // loop_footer
      %s18 = sadd.s32 1, %s14
    $region7: #{tpu_custom_call.1} parent=1 // loop_footer_branch
      %13 = sbr.rel target = $region3
    $region8: #{tpu_custom_call.1} parent=1 // loop_exit
      _
    %1547 = vsyncpa [#allocation4], 1
    %s1548 = scalar_lea.sflag [#allocation4], 1
    %1549 = vsyncpa %s1548, 1

</llo_original>
